<compile_context>
chip_gen: v7x
topology: tpu7x:2x2x1
jax: 0.10.0
libtpu: 0.0.40
codegen_flags: <defaults>
</compile_context>

<pallas_src>
import functools

import jax
import jax.numpy as jnp
from jax.experimental import pallas as pl
from jax.experimental.pallas import tpu as pltpu


# ----------------------------------------------------------------------------
# Fused Pallas kernel (all LSTM layers + FC), built for static sizes
# ----------------------------------------------------------------------------
def _make_fused_lstm_kernel(num_layers, T, B, H, compute_dtype):
    def kernel(*refs):
        # refs = [x_flat, (w_ih_t, w_hh_t, bias) * num_layers, w_fc_t, b_fc, out]
        x_ref = refs[0]
        layer_refs = refs[1:1 + 3 * num_layers]
        wfc_ref = refs[1 + 3 * num_layers]
        bfc_ref = refs[2 + 3 * num_layers]
        out_ref = refs[3 + 3 * num_layers]

        # Flat time-major input slab (T*B, I); cast MXU operands to
        # compute_dtype (bf16 on v6e/v7x path), accumulate in f32.
        x_flat = x_ref[...].astype(compute_dtype)

        wih = [layer_refs[3 * l + 0][...] for l in range(num_layers)]   # (in, 4H)
        whh = [layer_refs[3 * l + 1][...] for l in range(num_layers)]   # (H, 4H)
        bias = [layer_refs[3 * l + 2][...] for l in range(num_layers)]  # (1, 4H) f32

        # Layer 0's input projection has no recurrent dependency: hoist it as
        # a single (T*B, I) @ (I, 4H) matmul with the bias folded in.
        proj0 = jnp.dot(x_flat, wih[0],
                        preferred_element_type=jnp.float32) + bias[0]   # (T*B, 4H)

        h = [jnp.zeros((B, H), jnp.float32) for _ in range(num_layers)]
        c = [jnp.zeros((B, H), jnp.float32) for _ in range(num_layers)]
        # Per-step outputs of layers 0..L-2; each is an SSA value with a
        # single consumer one wave later, so live ranges stay short.
        h_below = [[None] * T for _ in range(num_layers - 1)]

        def cell_step(layer, t):
            if layer == 0:
                # Static, contiguous 2-row sublane slice of the hoisted
                # projection; only the recurrent dot sits on the serial path.
                gates = proj0[t * B:(t + 1) * B, :] + jnp.dot(
                    h[0].astype(compute_dtype), whh[0],
                    preferred_element_type=jnp.float32)
            else:
                # Per-step fused input projection (no join barrier on the
                # whole lower-layer sequence -> enables the wavefront).
                below = h_below[layer - 1][t].astype(compute_dtype)
                gates = (jnp.dot(below, wih[layer],
                                 preferred_element_type=jnp.float32)
                         + jnp.dot(h[layer].astype(compute_dtype), whh[layer],
                                   preferred_element_type=jnp.float32)
                         + bias[layer])                                  # (B, 4H)

            # Two full-width EUP ops instead of four per-gate ones; the gate
            # views are static lane slices.
            sig = jax.nn.sigmoid(gates)
            th = jnp.tanh(gates)
            i_g = sig[:, 0 * H:1 * H]
            f_g = sig[:, 1 * H:2 * H]
            g_g = th[:, 2 * H:3 * H]
            o_g = sig[:, 3 * H:4 * H]
            c[layer] = f_g * c[layer] + i_g * g_g
            h[layer] = o_g * jnp.tanh(c[layer])
            if layer < num_layers - 1:
                h_below[layer][t] = h[layer]

        # Wavefront schedule: serial critical path is T + L - 1 cell steps.
        for wave in range(T + num_layers - 1):
            for layer in range(num_layers):
                t = wave - layer
                if 0 <= t < T:
                    cell_step(layer, t)

        # Fused final Linear on the last layer's final hidden state
        # (== out[:, -1, :] in the PyTorch module).  Kept in f32.
        out = (jnp.dot(h[num_layers - 1], wfc_ref[...],
                       preferred_element_type=jnp.float32) + bfc_ref[...])
        out_ref[...] = out.astype(out_ref.dtype)

    return kernel


def _fused_forward(params, x_bti, weight_dtype):
    """Single pallas_call for the whole model. x_bti: (B, T, I)."""
    B, T, I = x_bti.shape
    H = params["lstm"][0]["w_hh_t"].shape[0]
    O = params["fc"]["w_t"].shape[1]
    num_layers = len(params["lstm"])

    # Flat time-major slab so every per-step read in the kernel is a static
    # contiguous sublane slice (tiny one-off XLA layout op at these sizes).
    x_flat = jnp.transpose(x_bti, (1, 0, 2)).reshape(T * B, I).astype(jnp.float32)

    inputs = [x_flat]
    for lp in params["lstm"]:
        inputs += [lp["w_ih_t"].astype(weight_dtype),
                   lp["w_hh_t"].astype(weight_dtype),
                   lp["bias"]]                      # bias stays f32
    inputs += [params["fc"]["w_t"], params["fc"]["b"]]

    vmem = pl.BlockSpec(memory_space=pltpu.MemorySpace.VMEM)
    return pl.pallas_call(
        _make_fused_lstm_kernel(num_layers, T, B, H, weight_dtype),
        out_shape=jax.ShapeDtypeStruct((B, O), jnp.float32),
        in_specs=[vmem] * len(inputs),
        out_specs=vmem,
    )(*inputs)


# ----------------------------------------------------------------------------
# Model: parameter init + forward (mirrors LSTM_MODEL.forward)
# ----------------------------------------------------------------------------
def init_params(key, input_size, hidden_size, num_layers, output_size):
    """Deterministic init mimicking torch defaults: U(-1/sqrt(H), 1/sqrt(H))."""
    H = hidden_size
    bound = 1.0 / jnp.sqrt(jnp.float32(H))
    params = {"lstm": []}
    for layer in range(num_layers):
        in_sz = input_size if layer == 0 else H
        key, k1, k2, k3, k4 = jax.random.split(key, 5)
        w_ih = jax.random.uniform(k1, (4 * H, in_sz), jnp.float32, -bound, bound)
        w_hh = jax.random.uniform(k2, (4 * H, H), jnp.float32, -bound, bound)
        b_ih = jax.random.uniform(k3, (4 * H,), jnp.float32, -bound, bound)
        b_hh = jax.random.uniform(k4, (4 * H,), jnp.float32, -bound, bound)
        params["lstm"].append({
            # pre-transposed for the kernel: (in, 4H) / (H, 4H); biases combined
            "w_ih_t": jnp.transpose(w_ih),
            "w_hh_t": jnp.transpose(w_hh),
            "bias": (b_ih + b_hh)[None, :],
        })
    key, k1, k2 = jax.random.split(key, 3)
    w_fc = jax.random.uniform(k1, (output_size, H), jnp.float32, -bound, bound)
    b_fc = jax.random.uniform(k2, (output_size,), jnp.float32, -bound, bound)
    params["fc"] = {"w_t": jnp.transpose(w_fc), "b": b_fc[None, :]}
    return params


@functools.partial(jax.jit, static_argnames=("weight_dtype",))
def lstm_model_forward(params, x_bti, weight_dtype=jnp.float32):
    """Equivalent of LSTM_MODEL.forward.

    x_bti: (B, T, input_size) batch_first, like the PyTorch module.
    weight_dtype: f32 for exact torch parity; bf16 halves MXU passes on the
      recurrent critical path (v6e/v7x) while keeping f32 accumulation/state.
    returns: squeezed (B, output_size) -> matches `out.squeeze()`.
    """
    out = _fused_forward(params, x_bti, weight_dtype)   # h0 = c0 = 0 in-kernel
    return jnp.squeeze(out)


# ----------------------------------------------------------------------------
# Pure-JAX reference for a quick sanity check
# ----------------------------------------------------------------------------
def _reference_forward(params, x_bti):
    x = jnp.transpose(x_bti, (1, 0, 2)).astype(jnp.float32)      # (T, B, I)
    for lp in params["lstm"]:
        T, B, _ = x.shape
        H = lp["w_hh_t"].shape[0]
        h = jnp.zeros((B, H), jnp.float32)
        c = jnp.zeros((B, H), jnp.float32)
        outs = []
        for t in range(T):
            gates = x[t] @ lp["w_ih_t"] + h @ lp["w_hh_t"] + lp["bias"]
            i_g = jax.nn.sigmoid(gates[:, 0 * H:1 * H])
            f_g = jax.nn.sigmoid(gates[:, 1 * H:2 * H])
            g_g = jnp.tanh(gates[:, 2 * H:3 * H])
            o_g = jax.nn.sigmoid(gates[:, 3 * H:4 * H])
            c = f_g * c + i_g * g_g
            h = o_g * jnp.tanh(c)
            outs.append(h)
        x = jnp.stack(outs, axis=0)
    out = x[-1] @ params["fc"]["w_t"] + params["fc"]["b"]
    return jnp.squeeze(out)


if __name__ == "__main__":
    # x: (batch=2, seq=8, input_size=8), hidden=32, num_layers=2, output=4
    batch, seq_len = 2, 8
    input_size, hidden_size, num_layers, output_size = 8, 32, 2, 4

    key = jax.random.PRNGKey(0)
    key, pkey, xkey = jax.random.split(key, 3)
    params = init_params(pkey, input_size, hidden_size, num_layers, output_size)
    x = jax.random.normal(xkey, (batch, seq_len, input_size), jnp.float32)

    ref = _reference_forward(params, x)

    # Exact-parity path (f32 weights) -- matches torch.nn.LSTM numerics.
    out_f32 = jax.block_until_ready(lstm_model_forward(params, x))
    assert out_f32.shape == ref.shape, (out_f32.shape, ref.shape)
    assert jnp.allclose(out_f32, ref, atol=1e-5, rtol=1e-5), (
        "f32 mismatch vs reference", float(jnp.max(jnp.abs(out_f32 - ref))))

    # bf16-weight path (v6e/v7x MXU optimization; f32 accumulate + f32 state).
    out_bf16 = jax.block_until_ready(
        lstm_model_forward(params, x, weight_dtype=jnp.bfloat16))
    assert out_bf16.shape == ref.shape, (out_bf16.shape, ref.shape)
    assert jnp.allclose(out_bf16, ref, atol=5e-2, rtol=5e-2), (
        "bf16 mismatch vs reference", float(jnp.max(jnp.abs(out_bf16 - ref))))

    print("KERNEL_OK")
</pallas_src>

<mosaic_0001>
module attributes {stable_mosaic.version = 11 : i64} {
  func.func @kernel(%arg0: memref<16x8xf32, #tpu.memory_space<vmem>>, %arg1: memref<8x128xf32, #tpu.memory_space<vmem>>, %arg2: memref<32x128xf32, #tpu.memory_space<vmem>>, %arg3: memref<1x128xf32, #tpu.memory_space<vmem>>, %arg4: memref<32x128xf32, #tpu.memory_space<vmem>>, %arg5: memref<32x128xf32, #tpu.memory_space<vmem>>, %arg6: memref<1x128xf32, #tpu.memory_space<vmem>>, %arg7: memref<32x4xf32, #tpu.memory_space<vmem>>, %arg8: memref<1x4xf32, #tpu.memory_space<vmem>>, %arg9: memref<2x4xf32, #tpu.memory_space<vmem>>) attributes {dimension_semantics = [], scalar_prefetch = 0 : i64, scratch_operands = 0 : i64, tpu.core_type = #tpu.core_type<tc>} {
    %c0 = arith.constant 0 : index
    %c0_0 = arith.constant 0 : index
    %0 = vector.load %arg0[%c0, %c0_0] : memref<16x8xf32, #tpu.memory_space<vmem>>, vector<16x8xf32>
    %c0_1 = arith.constant 0 : index
    %c0_2 = arith.constant 0 : index
    %1 = vector.load %arg1[%c0_1, %c0_2] : memref<8x128xf32, #tpu.memory_space<vmem>>, vector<8x128xf32>
    %c0_3 = arith.constant 0 : index
    %c0_4 = arith.constant 0 : index
    %2 = vector.load %arg4[%c0_3, %c0_4] : memref<32x128xf32, #tpu.memory_space<vmem>>, vector<32x128xf32>
    %c0_5 = arith.constant 0 : index
    %c0_6 = arith.constant 0 : index
    %3 = vector.load %arg2[%c0_5, %c0_6] : memref<32x128xf32, #tpu.memory_space<vmem>>, vector<32x128xf32>
    %c0_7 = arith.constant 0 : index
    %c0_8 = arith.constant 0 : index
    %4 = vector.load %arg5[%c0_7, %c0_8] : memref<32x128xf32, #tpu.memory_space<vmem>>, vector<32x128xf32>
    %c0_9 = arith.constant 0 : index
    %c0_10 = arith.constant 0 : index
    %5 = vector.load %arg3[%c0_9, %c0_10] : memref<1x128xf32, #tpu.memory_space<vmem>>, vector<1x128xf32>
    %c0_11 = arith.constant 0 : index
    %c0_12 = arith.constant 0 : index
    %6 = vector.load %arg6[%c0_11, %c0_12] : memref<1x128xf32, #tpu.memory_space<vmem>>, vector<1x128xf32>
    %cst = arith.constant dense<0.000000e+00> : vector<16x128xf32>
    %7 = tpu.matmul %0, %1, %cst {dimension_numbers = #tpu.dot_dimension_numbers<[1], [0], [0], [1], [0, 0, 1, 1], [], []>} : vector<16x8xf32>, vector<8x128xf32>, vector<16x128xf32> -> vector<16x128xf32>
    %8 = vector.broadcast %5 : vector<1x128xf32> to vector<16x128xf32>
    %9 = arith.addf %7, %8 : vector<16x128xf32>
    %cst_13 = arith.constant 0.000000e+00 : f32
    %10 = vector.broadcast %cst_13 : f32 to vector<2x32xf32>
    %cst_14 = arith.constant 0.000000e+00 : f32
    %11 = vector.broadcast %cst_14 : f32 to vector<2x32xf32>
    %cst_15 = arith.constant 0.000000e+00 : f32
    %12 = vector.broadcast %cst_15 : f32 to vector<2x32xf32>
    %cst_16 = arith.constant 0.000000e+00 : f32
    %13 = vector.broadcast %cst_16 : f32 to vector<2x32xf32>
    %14 = vector.extract_strided_slice %9 {offsets = [0, 0], sizes = [2, 128], strides = [1, 1]} : vector<16x128xf32> to vector<2x128xf32>
    %cst_17 = arith.constant dense<0.000000e+00> : vector<2x128xf32>
    %15 = tpu.matmul %10, %3, %cst_17 {dimension_numbers = #tpu.dot_dimension_numbers<[1], [0], [0], [1], [0, 0, 1, 1], [], []>} : vector<2x32xf32>, vector<32x128xf32>, vector<2x128xf32> -> vector<2x128xf32>
    %16 = arith.addf %14, %15 : vector<2x128xf32>
    %17 = arith.negf %16 : vector<2x128xf32>
    %18 = math.exp %17 : vector<2x128xf32>
    %cst_18 = arith.constant 1.000000e+00 : f32
    %19 = vector.broadcast %cst_18 : f32 to vector<2x128xf32>
    %20 = arith.addf %19, %18 : vector<2x128xf32>
    %21 = arith.divf %19, %20 : vector<2x128xf32>
    %22 = math.tanh %16 : vector<2x128xf32>
    %23 = vector.extract_strided_slice %21 {offsets = [0, 0], sizes = [2, 32], strides = [1, 1]} : vector<2x128xf32> to vector<2x32xf32>
    %24 = vector.extract_strided_slice %21 {offsets = [0, 32], sizes = [2, 32], strides = [1, 1]} : vector<2x128xf32> to vector<2x32xf32>
    %25 = vector.extract_strided_slice %22 {offsets = [0, 64], sizes = [2, 32], strides = [1, 1]} : vector<2x128xf32> to vector<2x32xf32>
    %26 = vector.extract_strided_slice %21 {offsets = [0, 96], sizes = [2, 32], strides = [1, 1]} : vector<2x128xf32> to vector<2x32xf32>
    %27 = arith.mulf %24, %12 : vector<2x32xf32>
    %28 = arith.mulf %23, %25 : vector<2x32xf32>
    %29 = arith.addf %27, %28 : vector<2x32xf32>
    %30 = math.tanh %29 : vector<2x32xf32>
    %31 = arith.mulf %26, %30 : vector<2x32xf32>
    %32 = vector.extract_strided_slice %9 {offsets = [2, 0], sizes = [2, 128], strides = [1, 1]} : vector<16x128xf32> to vector<2x128xf32>
    %cst_19 = arith.constant dense<0.000000e+00> : vector<2x128xf32>
    %33 = tpu.matmul %31, %3, %cst_19 {dimension_numbers = #tpu.dot_dimension_numbers<[1], [0], [0], [1], [0, 0, 1, 1], [], []>} : vector<2x32xf32>, vector<32x128xf32>, vector<2x128xf32> -> vector<2x128xf32>
    %34 = arith.addf %32, %33 : vector<2x128xf32>
    %35 = arith.negf %34 : vector<2x128xf32>
    %36 = math.exp %35 : vector<2x128xf32>
    %cst_20 = arith.constant 1.000000e+00 : f32
    %37 = vector.broadcast %cst_20 : f32 to vector<2x128xf32>
    %38 = arith.addf %37, %36 : vector<2x128xf32>
    %39 = arith.divf %37, %38 : vector<2x128xf32>
    %40 = math.tanh %34 : vector<2x128xf32>
    %41 = vector.extract_strided_slice %39 {offsets = [0, 0], sizes = [2, 32], strides = [1, 1]} : vector<2x128xf32> to vector<2x32xf32>
    %42 = vector.extract_strided_slice %39 {offsets = [0, 32], sizes = [2, 32], strides = [1, 1]} : vector<2x128xf32> to vector<2x32xf32>
    %43 = vector.extract_strided_slice %40 {offsets = [0, 64], sizes = [2, 32], strides = [1, 1]} : vector<2x128xf32> to vector<2x32xf32>
    %44 = vector.extract_strided_slice %39 {offsets = [0, 96], sizes = [2, 32], strides = [1, 1]} : vector<2x128xf32> to vector<2x32xf32>
    %45 = arith.mulf %42, %29 : vector<2x32xf32>
    %46 = arith.mulf %41, %43 : vector<2x32xf32>
    %47 = arith.addf %45, %46 : vector<2x32xf32>
    %48 = math.tanh %47 : vector<2x32xf32>
    %49 = arith.mulf %44, %48 : vector<2x32xf32>
    %cst_21 = arith.constant dense<0.000000e+00> : vector<2x128xf32>
    %50 = tpu.matmul %31, %2, %cst_21 {dimension_numbers = #tpu.dot_dimension_numbers<[1], [0], [0], [1], [0, 0, 1, 1], [], []>} : vector<2x32xf32>, vector<32x128xf32>, vector<2x128xf32> -> vector<2x128xf32>
    %cst_22 = arith.constant dense<0.000000e+00> : vector<2x128xf32>
    %51 = tpu.matmul %11, %4, %cst_22 {dimension_numbers = #tpu.dot_dimension_numbers<[1], [0], [0], [1], [0, 0, 1, 1], [], []>} : vector<2x32xf32>, vector<32x128xf32>, vector<2x128xf32> -> vector<2x128xf32>
    %52 = arith.addf %50, %51 : vector<2x128xf32>
    %53 = vector.broadcast %6 : vector<1x128xf32> to vector<2x128xf32>
    %54 = arith.addf %52, %53 : vector<2x128xf32>
    %55 = arith.negf %54 : vector<2x128xf32>
    %56 = math.exp %55 : vector<2x128xf32>
    %cst_23 = arith.constant 1.000000e+00 : f32
    %57 = vector.broadcast %cst_23 : f32 to vector<2x128xf32>
    %58 = arith.addf %57, %56 : vector<2x128xf32>
    %59 = arith.divf %57, %58 : vector<2x128xf32>
    %60 = math.tanh %54 : vector<2x128xf32>
    %61 = vector.extract_strided_slice %59 {offsets = [0, 0], sizes = [2, 32], strides = [1, 1]} : vector<2x128xf32> to vector<2x32xf32>
    %62 = vector.extract_strided_slice %59 {offsets = [0, 32], sizes = [2, 32], strides = [1, 1]} : vector<2x128xf32> to vector<2x32xf32>
    %63 = vector.extract_strided_slice %60 {offsets = [0, 64], sizes = [2, 32], strides = [1, 1]} : vector<2x128xf32> to vector<2x32xf32>
    %64 = vector.extract_strided_slice %59 {offsets = [0, 96], sizes = [2, 32], strides = [1, 1]} : vector<2x128xf32> to vector<2x32xf32>
    %65 = arith.mulf %62, %13 : vector<2x32xf32>
    %66 = arith.mulf %61, %63 : vector<2x32xf32>
    %67 = arith.addf %65, %66 : vector<2x32xf32>
    %68 = math.tanh %67 : vector<2x32xf32>
    %69 = arith.mulf %64, %68 : vector<2x32xf32>
    %70 = vector.extract_strided_slice %9 {offsets = [4, 0], sizes = [2, 128], strides = [1, 1]} : vector<16x128xf32> to vector<2x128xf32>
    %cst_24 = arith.constant dense<0.000000e+00> : vector<2x128xf32>
    %71 = tpu.matmul %49, %3, %cst_24 {dimension_numbers = #tpu.dot_dimension_numbers<[1], [0], [0], [1], [0, 0, 1, 1], [], []>} : vector<2x32xf32>, vector<32x128xf32>, vector<2x128xf32> -> vector<2x128xf32>
    %72 = arith.addf %70, %71 : vector<2x128xf32>
    %73 = arith.negf %72 : vector<2x128xf32>
    %74 = math.exp %73 : vector<2x128xf32>
    %cst_25 = arith.constant 1.000000e+00 : f32
    %75 = vector.broadcast %cst_25 : f32 to vector<2x128xf32>
    %76 = arith.addf %75, %74 : vector<2x128xf32>
    %77 = arith.divf %75, %76 : vector<2x128xf32>
    %78 = math.tanh %72 : vector<2x128xf32>
    %79 = vector.extract_strided_slice %77 {offsets = [0, 0], sizes = [2, 32], strides = [1, 1]} : vector<2x128xf32> to vector<2x32xf32>
    %80 = vector.extract_strided_slice %77 {offsets = [0, 32], sizes = [2, 32], strides = [1, 1]} : vector<2x128xf32> to vector<2x32xf32>
    %81 = vector.extract_strided_slice %78 {offsets = [0, 64], sizes = [2, 32], strides = [1, 1]} : vector<2x128xf32> to vector<2x32xf32>
    %82 = vector.extract_strided_slice %77 {offsets = [0, 96], sizes = [2, 32], strides = [1, 1]} : vector<2x128xf32> to vector<2x32xf32>
    %83 = arith.mulf %80, %47 : vector<2x32xf32>
    %84 = arith.mulf %79, %81 : vector<2x32xf32>
    %85 = arith.addf %83, %84 : vector<2x32xf32>
    %86 = math.tanh %85 : vector<2x32xf32>
    %87 = arith.mulf %82, %86 : vector<2x32xf32>
    %cst_26 = arith.constant dense<0.000000e+00> : vector<2x128xf32>
    %88 = tpu.matmul %49, %2, %cst_26 {dimension_numbers = #tpu.dot_dimension_numbers<[1], [0], [0], [1], [0, 0, 1, 1], [], []>} : vector<2x32xf32>, vector<32x128xf32>, vector<2x128xf32> -> vector<2x128xf32>
    %cst_27 = arith.constant dense<0.000000e+00> : vector<2x128xf32>
    %89 = tpu.matmul %69, %4, %cst_27 {dimension_numbers = #tpu.dot_dimension_numbers<[1], [0], [0], [1], [0, 0, 1, 1], [], []>} : vector<2x32xf32>, vector<32x128xf32>, vector<2x128xf32> -> vector<2x128xf32>
    %90 = arith.addf %88, %89 : vector<2x128xf32>
    %91 = vector.broadcast %6 : vector<1x128xf32> to vector<2x128xf32>
    %92 = arith.addf %90, %91 : vector<2x128xf32>
    %93 = arith.negf %92 : vector<2x128xf32>
    %94 = math.exp %93 : vector<2x128xf32>
    %cst_28 = arith.constant 1.000000e+00 : f32
    %95 = vector.broadcast %cst_28 : f32 to vector<2x128xf32>
    %96 = arith.addf %95, %94 : vector<2x128xf32>
    %97 = arith.divf %95, %96 : vector<2x128xf32>
    %98 = math.tanh %92 : vector<2x128xf32>
    %99 = vector.extract_strided_slice %97 {offsets = [0, 0], sizes = [2, 32], strides = [1, 1]} : vector<2x128xf32> to vector<2x32xf32>
    %100 = vector.extract_strided_slice %97 {offsets = [0, 32], sizes = [2, 32], strides = [1, 1]} : vector<2x128xf32> to vector<2x32xf32>
    %101 = vector.extract_strided_slice %98 {offsets = [0, 64], sizes = [2, 32], strides = [1, 1]} : vector<2x128xf32> to vector<2x32xf32>
    %102 = vector.extract_strided_slice %97 {offsets = [0, 96], sizes = [2, 32], strides = [1, 1]} : vector<2x128xf32> to vector<2x32xf32>
    %103 = arith.mulf %100, %67 : vector<2x32xf32>
    %104 = arith.mulf %99, %101 : vector<2x32xf32>
    %105 = arith.addf %103, %104 : vector<2x32xf32>
    %106 = math.tanh %105 : vector<2x32xf32>
    %107 = arith.mulf %102, %106 : vector<2x32xf32>
    %108 = vector.extract_strided_slice %9 {offsets = [6, 0], sizes = [2, 128], strides = [1, 1]} : vector<16x128xf32> to vector<2x128xf32>
    %cst_29 = arith.constant dense<0.000000e+00> : vector<2x128xf32>
    %109 = tpu.matmul %87, %3, %cst_29 {dimension_numbers = #tpu.dot_dimension_numbers<[1], [0], [0], [1], [0, 0, 1, 1], [], []>} : vector<2x32xf32>, vector<32x128xf32>, vector<2x128xf32> -> vector<2x128xf32>
    %110 = arith.addf %108, %109 : vector<2x128xf32>
    %111 = arith.negf %110 : vector<2x128xf32>
    %112 = math.exp %111 : vector<2x128xf32>
    %cst_30 = arith.constant 1.000000e+00 : f32
    %113 = vector.broadcast %cst_30 : f32 to vector<2x128xf32>
    %114 = arith.addf %113, %112 : vector<2x128xf32>
    %115 = arith.divf %113, %114 : vector<2x128xf32>
    %116 = math.tanh %110 : vector<2x128xf32>
    %117 = vector.extract_strided_slice %115 {offsets = [0, 0], sizes = [2, 32], strides = [1, 1]} : vector<2x128xf32> to vector<2x32xf32>
    %118 = vector.extract_strided_slice %115 {offsets = [0, 32], sizes = [2, 32], strides = [1, 1]} : vector<2x128xf32> to vector<2x32xf32>
    %119 = vector.extract_strided_slice %116 {offsets = [0, 64], sizes = [2, 32], strides = [1, 1]} : vector<2x128xf32> to vector<2x32xf32>
    %120 = vector.extract_strided_slice %115 {offsets = [0, 96], sizes = [2, 32], strides = [1, 1]} : vector<2x128xf32> to vector<2x32xf32>
    %121 = arith.mulf %118, %85 : vector<2x32xf32>
    %122 = arith.mulf %117, %119 : vector<2x32xf32>
    %123 = arith.addf %121, %122 : vector<2x32xf32>
    %124 = math.tanh %123 : vector<2x32xf32>
    %125 = arith.mulf %120, %124 : vector<2x32xf32>
    %cst_31 = arith.constant dense<0.000000e+00> : vector<2x128xf32>
    %126 = tpu.matmul %87, %2, %cst_31 {dimension_numbers = #tpu.dot_dimension_numbers<[1], [0], [0], [1], [0, 0, 1, 1], [], []>} : vector<2x32xf32>, vector<32x128xf32>, vector<2x128xf32> -> vector<2x128xf32>
    %cst_32 = arith.constant dense<0.000000e+00> : vector<2x128xf32>
    %127 = tpu.matmul %107, %4, %cst_32 {dimension_numbers = #tpu.dot_dimension_numbers<[1], [0], [0], [1], [0, 0, 1, 1], [], []>} : vector<2x32xf32>, vector<32x128xf32>, vector<2x128xf32> -> vector<2x128xf32>
    %128 = arith.addf %126, %127 : vector<2x128xf32>
    %129 = vector.broadcast %6 : vector<1x128xf32> to vector<2x128xf32>
    %130 = arith.addf %128, %129 : vector<2x128xf32>
    %131 = arith.negf %130 : vector<2x128xf32>
    %132 = math.exp %131 : vector<2x128xf32>
    %cst_33 = arith.constant 1.000000e+00 : f32
    %133 = vector.broadcast %cst_33 : f32 to vector<2x128xf32>
    %134 = arith.addf %133, %132 : vector<2x128xf32>
    %135 = arith.divf %133, %134 : vector<2x128xf32>
    %136 = math.tanh %130 : vector<2x128xf32>
    %137 = vector.extract_strided_slice %135 {offsets = [0, 0], sizes = [2, 32], strides = [1, 1]} : vector<2x128xf32> to vector<2x32xf32>
    %138 = vector.extract_strided_slice %135 {offsets = [0, 32], sizes = [2, 32], strides = [1, 1]} : vector<2x128xf32> to vector<2x32xf32>
    %139 = vector.extract_strided_slice %136 {offsets = [0, 64], sizes = [2, 32], strides = [1, 1]} : vector<2x128xf32> to vector<2x32xf32>
    %140 = vector.extract_strided_slice %135 {offsets = [0, 96], sizes = [2, 32], strides = [1, 1]} : vector<2x128xf32> to vector<2x32xf32>
    %141 = arith.mulf %138, %105 : vector<2x32xf32>
    %142 = arith.mulf %137, %139 : vector<2x32xf32>
    %143 = arith.addf %141, %142 : vector<2x32xf32>
    %144 = math.tanh %143 : vector<2x32xf32>
    %145 = arith.mulf %140, %144 : vector<2x32xf32>
    %146 = vector.extract_strided_slice %9 {offsets = [8, 0], sizes = [2, 128], strides = [1, 1]} : vector<16x128xf32> to vector<2x128xf32>
    %cst_34 = arith.constant dense<0.000000e+00> : vector<2x128xf32>
    %147 = tpu.matmul %125, %3, %cst_34 {dimension_numbers = #tpu.dot_dimension_numbers<[1], [0], [0], [1], [0, 0, 1, 1], [], []>} : vector<2x32xf32>, vector<32x128xf32>, vector<2x128xf32> -> vector<2x128xf32>
    %148 = arith.addf %146, %147 : vector<2x128xf32>
    %149 = arith.negf %148 : vector<2x128xf32>
    %150 = math.exp %149 : vector<2x128xf32>
    %cst_35 = arith.constant 1.000000e+00 : f32
    %151 = vector.broadcast %cst_35 : f32 to vector<2x128xf32>
    %152 = arith.addf %151, %150 : vector<2x128xf32>
    %153 = arith.divf %151, %152 : vector<2x128xf32>
    %154 = math.tanh %148 : vector<2x128xf32>
    %155 = vector.extract_strided_slice %153 {offsets = [0, 0], sizes = [2, 32], strides = [1, 1]} : vector<2x128xf32> to vector<2x32xf32>
    %156 = vector.extract_strided_slice %153 {offsets = [0, 32], sizes = [2, 32], strides = [1, 1]} : vector<2x128xf32> to vector<2x32xf32>
    %157 = vector.extract_strided_slice %154 {offsets = [0, 64], sizes = [2, 32], strides = [1, 1]} : vector<2x128xf32> to vector<2x32xf32>
    %158 = vector.extract_strided_slice %153 {offsets = [0, 96], sizes = [2, 32], strides = [1, 1]} : vector<2x128xf32> to vector<2x32xf32>
    %159 = arith.mulf %156, %123 : vector<2x32xf32>
    %160 = arith.mulf %155, %157 : vector<2x32xf32>
    %161 = arith.addf %159, %160 : vector<2x32xf32>
    %162 = math.tanh %161 : vector<2x32xf32>
    %163 = arith.mulf %158, %162 : vector<2x32xf32>
    %cst_36 = arith.constant dense<0.000000e+00> : vector<2x128xf32>
    %164 = tpu.matmul %125, %2, %cst_36 {dimension_numbers = #tpu.dot_dimension_numbers<[1], [0], [0], [1], [0, 0, 1, 1], [], []>} : vector<2x32xf32>, vector<32x128xf32>, vector<2x128xf32> -> vector<2x128xf32>
    %cst_37 = arith.constant dense<0.000000e+00> : vector<2x128xf32>
    %165 = tpu.matmul %145, %4, %cst_37 {dimension_numbers = #tpu.dot_dimension_numbers<[1], [0], [0], [1], [0, 0, 1, 1], [], []>} : vector<2x32xf32>, vector<32x128xf32>, vector<2x128xf32> -> vector<2x128xf32>
    %166 = arith.addf %164, %165 : vector<2x128xf32>
    %167 = vector.broadcast %6 : vector<1x128xf32> to vector<2x128xf32>
    %168 = arith.addf %166, %167 : vector<2x128xf32>
    %169 = arith.negf %168 : vector<2x128xf32>
    %170 = math.exp %169 : vector<2x128xf32>
    %cst_38 = arith.constant 1.000000e+00 : f32
    %171 = vector.broadcast %cst_38 : f32 to vector<2x128xf32>
    %172 = arith.addf %171, %170 : vector<2x128xf32>
    %173 = arith.divf %171, %172 : vector<2x128xf32>
    %174 = math.tanh %168 : vector<2x128xf32>
    %175 = vector.extract_strided_slice %173 {offsets = [0, 0], sizes = [2, 32], strides = [1, 1]} : vector<2x128xf32> to vector<2x32xf32>
    %176 = vector.extract_strided_slice %173 {offsets = [0, 32], sizes = [2, 32], strides = [1, 1]} : vector<2x128xf32> to vector<2x32xf32>
    %177 = vector.extract_strided_slice %174 {offsets = [0, 64], sizes = [2, 32], strides = [1, 1]} : vector<2x128xf32> to vector<2x32xf32>
    %178 = vector.extract_strided_slice %173 {offsets = [0, 96], sizes = [2, 32], strides = [1, 1]} : vector<2x128xf32> to vector<2x32xf32>
    %179 = arith.mulf %176, %143 : vector<2x32xf32>
    %180 = arith.mulf %175, %177 : vector<2x32xf32>
    %181 = arith.addf %179, %180 : vector<2x32xf32>
    %182 = math.tanh %181 : vector<2x32xf32>
    %183 = arith.mulf %178, %182 : vector<2x32xf32>
    %184 = vector.extract_strided_slice %9 {offsets = [10, 0], sizes = [2, 128], strides = [1, 1]} : vector<16x128xf32> to vector<2x128xf32>
    %cst_39 = arith.constant dense<0.000000e+00> : vector<2x128xf32>
    %185 = tpu.matmul %163, %3, %cst_39 {dimension_numbers = #tpu.dot_dimension_numbers<[1], [0], [0], [1], [0, 0, 1, 1], [], []>} : vector<2x32xf32>, vector<32x128xf32>, vector<2x128xf32> -> vector<2x128xf32>
    %186 = arith.addf %184, %185 : vector<2x128xf32>
    %187 = arith.negf %186 : vector<2x128xf32>
    %188 = math.exp %187 : vector<2x128xf32>
    %cst_40 = arith.constant 1.000000e+00 : f32
    %189 = vector.broadcast %cst_40 : f32 to vector<2x128xf32>
    %190 = arith.addf %189, %188 : vector<2x128xf32>
    %191 = arith.divf %189, %190 : vector<2x128xf32>
    %192 = math.tanh %186 : vector<2x128xf32>
    %193 = vector.extract_strided_slice %191 {offsets = [0, 0], sizes = [2, 32], strides = [1, 1]} : vector<2x128xf32> to vector<2x32xf32>
    %194 = vector.extract_strided_slice %191 {offsets = [0, 32], sizes = [2, 32], strides = [1, 1]} : vector<2x128xf32> to vector<2x32xf32>
    %195 = vector.extract_strided_slice %192 {offsets = [0, 64], sizes = [2, 32], strides = [1, 1]} : vector<2x128xf32> to vector<2x32xf32>
    %196 = vector.extract_strided_slice %191 {offsets = [0, 96], sizes = [2, 32], strides = [1, 1]} : vector<2x128xf32> to vector<2x32xf32>
    %197 = arith.mulf %194, %161 : vector<2x32xf32>
    %198 = arith.mulf %193, %195 : vector<2x32xf32>
    %199 = arith.addf %197, %198 : vector<2x32xf32>
    %200 = math.tanh %199 : vector<2x32xf32>
    %201 = arith.mulf %196, %200 : vector<2x32xf32>
    %cst_41 = arith.constant dense<0.000000e+00> : vector<2x128xf32>
    %202 = tpu.matmul %163, %2, %cst_41 {dimension_numbers = #tpu.dot_dimension_numbers<[1], [0], [0], [1], [0, 0, 1, 1], [], []>} : vector<2x32xf32>, vector<32x128xf32>, vector<2x128xf32> -> vector<2x128xf32>
    %cst_42 = arith.constant dense<0.000000e+00> : vector<2x128xf32>
    %203 = tpu.matmul %183, %4, %cst_42 {dimension_numbers = #tpu.dot_dimension_numbers<[1], [0], [0], [1], [0, 0, 1, 1], [], []>} : vector<2x32xf32>, vector<32x128xf32>, vector<2x128xf32> -> vector<2x128xf32>
    %204 = arith.addf %202, %203 : vector<2x128xf32>
    %205 = vector.broadcast %6 : vector<1x128xf32> to vector<2x128xf32>
    %206 = arith.addf %204, %205 : vector<2x128xf32>
    %207 = arith.negf %206 : vector<2x128xf32>
    %208 = math.exp %207 : vector<2x128xf32>
    %cst_43 = arith.constant 1.000000e+00 : f32
    %209 = vector.broadcast %cst_43 : f32 to vector<2x128xf32>
    %210 = arith.addf %209, %208 : vector<2x128xf32>
    %211 = arith.divf %209, %210 : vector<2x128xf32>
    %212 = math.tanh %206 : vector<2x128xf32>
    %213 = vector.extract_strided_slice %211 {offsets = [0, 0], sizes = [2, 32], strides = [1, 1]} : vector<2x128xf32> to vector<2x32xf32>
    %214 = vector.extract_strided_slice %211 {offsets = [0, 32], sizes = [2, 32], strides = [1, 1]} : vector<2x128xf32> to vector<2x32xf32>
    %215 = vector.extract_strided_slice %212 {offsets = [0, 64], sizes = [2, 32], strides = [1, 1]} : vector<2x128xf32> to vector<2x32xf32>
    %216 = vector.extract_strided_slice %211 {offsets = [0, 96], sizes = [2, 32], strides = [1, 1]} : vector<2x128xf32> to vector<2x32xf32>
    %217 = arith.mulf %214, %181 : vector<2x32xf32>
    %218 = arith.mulf %213, %215 : vector<2x32xf32>
    %219 = arith.addf %217, %218 : vector<2x32xf32>
    %220 = math.tanh %219 : vector<2x32xf32>
    %221 = arith.mulf %216, %220 : vector<2x32xf32>
    %222 = vector.extract_strided_slice %9 {offsets = [12, 0], sizes = [2, 128], strides = [1, 1]} : vector<16x128xf32> to vector<2x128xf32>
    %cst_44 = arith.constant dense<0.000000e+00> : vector<2x128xf32>
    %223 = tpu.matmul %201, %3, %cst_44 {dimension_numbers = #tpu.dot_dimension_numbers<[1], [0], [0], [1], [0, 0, 1, 1], [], []>} : vector<2x32xf32>, vector<32x128xf32>, vector<2x128xf32> -> vector<2x128xf32>
    %224 = arith.addf %222, %223 : vector<2x128xf32>
    %225 = arith.negf %224 : vector<2x128xf32>
    %226 = math.exp %225 : vector<2x128xf32>
    %cst_45 = arith.constant 1.000000e+00 : f32
    %227 = vector.broadcast %cst_45 : f32 to vector<2x128xf32>
    %228 = arith.addf %227, %226 : vector<2x128xf32>
    %229 = arith.divf %227, %228 : vector<2x128xf32>
    %230 = math.tanh %224 : vector<2x128xf32>
    %231 = vector.extract_strided_slice %229 {offsets = [0, 0], sizes = [2, 32], strides = [1, 1]} : vector<2x128xf32> to vector<2x32xf32>
    %232 = vector.extract_strided_slice %229 {offsets = [0, 32], sizes = [2, 32], strides = [1, 1]} : vector<2x128xf32> to vector<2x32xf32>
    %233 = vector.extract_strided_slice %230 {offsets = [0, 64], sizes = [2, 32], strides = [1, 1]} : vector<2x128xf32> to vector<2x32xf32>
    %234 = vector.extract_strided_slice %229 {offsets = [0, 96], sizes = [2, 32], strides = [1, 1]} : vector<2x128xf32> to vector<2x32xf32>
    %235 = arith.mulf %232, %199 : vector<2x32xf32>
    %236 = arith.mulf %231, %233 : vector<2x32xf32>
    %237 = arith.addf %235, %236 : vector<2x32xf32>
    %238 = math.tanh %237 : vector<2x32xf32>
    %239 = arith.mulf %234, %238 : vector<2x32xf32>
    %cst_46 = arith.constant dense<0.000000e+00> : vector<2x128xf32>
    %240 = tpu.matmul %201, %2, %cst_46 {dimension_numbers = #tpu.dot_dimension_numbers<[1], [0], [0], [1], [0, 0, 1, 1], [], []>} : vector<2x32xf32>, vector<32x128xf32>, vector<2x128xf32> -> vector<2x128xf32>
    %cst_47 = arith.constant dense<0.000000e+00> : vector<2x128xf32>
    %241 = tpu.matmul %221, %4, %cst_47 {dimension_numbers = #tpu.dot_dimension_numbers<[1], [0], [0], [1], [0, 0, 1, 1], [], []>} : vector<2x32xf32>, vector<32x128xf32>, vector<2x128xf32> -> vector<2x128xf32>
    %242 = arith.addf %240, %241 : vector<2x128xf32>
    %243 = vector.broadcast %6 : vector<1x128xf32> to vector<2x128xf32>
    %244 = arith.addf %242, %243 : vector<2x128xf32>
    %245 = arith.negf %244 : vector<2x128xf32>
    %246 = math.exp %245 : vector<2x128xf32>
    %cst_48 = arith.constant 1.000000e+00 : f32
    %247 = vector.broadcast %cst_48 : f32 to vector<2x128xf32>
    %248 = arith.addf %247, %246 : vector<2x128xf32>
    %249 = arith.divf %247, %248 : vector<2x128xf32>
    %250 = math.tanh %244 : vector<2x128xf32>
    %251 = vector.extract_strided_slice %249 {offsets = [0, 0], sizes = [2, 32], strides = [1, 1]} : vector<2x128xf32> to vector<2x32xf32>
    %252 = vector.extract_strided_slice %249 {offsets = [0, 32], sizes = [2, 32], strides = [1, 1]} : vector<2x128xf32> to vector<2x32xf32>
    %253 = vector.extract_strided_slice %250 {offsets = [0, 64], sizes = [2, 32], strides = [1, 1]} : vector<2x128xf32> to vector<2x32xf32>
    %254 = vector.extract_strided_slice %249 {offsets = [0, 96], sizes = [2, 32], strides = [1, 1]} : vector<2x128xf32> to vector<2x32xf32>
    %255 = arith.mulf %252, %219 : vector<2x32xf32>
    %256 = arith.mulf %251, %253 : vector<2x32xf32>
    %257 = arith.addf %255, %256 : vector<2x32xf32>
    %258 = math.tanh %257 : vector<2x32xf32>
    %259 = arith.mulf %254, %258 : vector<2x32xf32>
    %260 = vector.extract_strided_slice %9 {offsets = [14, 0], sizes = [2, 128], strides = [1, 1]} : vector<16x128xf32> to vector<2x128xf32>
    %cst_49 = arith.constant dense<0.000000e+00> : vector<2x128xf32>
    %261 = tpu.matmul %239, %3, %cst_49 {dimension_numbers = #tpu.dot_dimension_numbers<[1], [0], [0], [1], [0, 0, 1, 1], [], []>} : vector<2x32xf32>, vector<32x128xf32>, vector<2x128xf32> -> vector<2x128xf32>
    %262 = arith.addf %260, %261 : vector<2x128xf32>
    %263 = arith.negf %262 : vector<2x128xf32>
    %264 = math.exp %263 : vector<2x128xf32>
    %cst_50 = arith.constant 1.000000e+00 : f32
    %265 = vector.broadcast %cst_50 : f32 to vector<2x128xf32>
    %266 = arith.addf %265, %264 : vector<2x128xf32>
    %267 = arith.divf %265, %266 : vector<2x128xf32>
    %268 = math.tanh %262 : vector<2x128xf32>
    %269 = vector.extract_strided_slice %267 {offsets = [0, 0], sizes = [2, 32], strides = [1, 1]} : vector<2x128xf32> to vector<2x32xf32>
    %270 = vector.extract_strided_slice %267 {offsets = [0, 32], sizes = [2, 32], strides = [1, 1]} : vector<2x128xf32> to vector<2x32xf32>
    %271 = vector.extract_strided_slice %268 {offsets = [0, 64], sizes = [2, 32], strides = [1, 1]} : vector<2x128xf32> to vector<2x32xf32>
    %272 = vector.extract_strided_slice %267 {offsets = [0, 96], sizes = [2, 32], strides = [1, 1]} : vector<2x128xf32> to vector<2x32xf32>
    %273 = arith.mulf %270, %237 : vector<2x32xf32>
    %274 = arith.mulf %269, %271 : vector<2x32xf32>
    %275 = arith.addf %273, %274 : vector<2x32xf32>
    %276 = math.tanh %275 : vector<2x32xf32>
    %277 = arith.mulf %272, %276 : vector<2x32xf32>
    %cst_51 = arith.constant dense<0.000000e+00> : vector<2x128xf32>
    %278 = tpu.matmul %239, %2, %cst_51 {dimension_numbers = #tpu.dot_dimension_numbers<[1], [0], [0], [1], [0, 0, 1, 1], [], []>} : vector<2x32xf32>, vector<32x128xf32>, vector<2x128xf32> -> vector<2x128xf32>
    %cst_52 = arith.constant dense<0.000000e+00> : vector<2x128xf32>
    %279 = tpu.matmul %259, %4, %cst_52 {dimension_numbers = #tpu.dot_dimension_numbers<[1], [0], [0], [1], [0, 0, 1, 1], [], []>} : vector<2x32xf32>, vector<32x128xf32>, vector<2x128xf32> -> vector<2x128xf32>
    %280 = arith.addf %278, %279 : vector<2x128xf32>
    %281 = vector.broadcast %6 : vector<1x128xf32> to vector<2x128xf32>
    %282 = arith.addf %280, %281 : vector<2x128xf32>
    %283 = arith.negf %282 : vector<2x128xf32>
    %284 = math.exp %283 : vector<2x128xf32>
    %cst_53 = arith.constant 1.000000e+00 : f32
    %285 = vector.broadcast %cst_53 : f32 to vector<2x128xf32>
    %286 = arith.addf %285, %284 : vector<2x128xf32>
    %287 = arith.divf %285, %286 : vector<2x128xf32>
    %288 = math.tanh %282 : vector<2x128xf32>
    %289 = vector.extract_strided_slice %287 {offsets = [0, 0], sizes = [2, 32], strides = [1, 1]} : vector<2x128xf32> to vector<2x32xf32>
    %290 = vector.extract_strided_slice %287 {offsets = [0, 32], sizes = [2, 32], strides = [1, 1]} : vector<2x128xf32> to vector<2x32xf32>
    %291 = vector.extract_strided_slice %288 {offsets = [0, 64], sizes = [2, 32], strides = [1, 1]} : vector<2x128xf32> to vector<2x32xf32>
    %292 = vector.extract_strided_slice %287 {offsets = [0, 96], sizes = [2, 32], strides = [1, 1]} : vector<2x128xf32> to vector<2x32xf32>
    %293 = arith.mulf %290, %257 : vector<2x32xf32>
    %294 = arith.mulf %289, %291 : vector<2x32xf32>
    %295 = arith.addf %293, %294 : vector<2x32xf32>
    %296 = math.tanh %295 : vector<2x32xf32>
    %297 = arith.mulf %292, %296 : vector<2x32xf32>
    %cst_54 = arith.constant dense<0.000000e+00> : vector<2x128xf32>
    %298 = tpu.matmul %277, %2, %cst_54 {dimension_numbers = #tpu.dot_dimension_numbers<[1], [0], [0], [1], [0, 0, 1, 1], [], []>} : vector<2x32xf32>, vector<32x128xf32>, vector<2x128xf32> -> vector<2x128xf32>
    %cst_55 = arith.constant dense<0.000000e+00> : vector<2x128xf32>
    %299 = tpu.matmul %297, %4, %cst_55 {dimension_numbers = #tpu.dot_dimension_numbers<[1], [0], [0], [1], [0, 0, 1, 1], [], []>} : vector<2x32xf32>, vector<32x128xf32>, vector<2x128xf32> -> vector<2x128xf32>
    %300 = arith.addf %298, %299 : vector<2x128xf32>
    %301 = vector.broadcast %6 : vector<1x128xf32> to vector<2x128xf32>
    %302 = arith.addf %300, %301 : vector<2x128xf32>
    %303 = arith.negf %302 : vector<2x128xf32>
    %304 = math.exp %303 : vector<2x128xf32>
    %cst_56 = arith.constant 1.000000e+00 : f32
    %305 = vector.broadcast %cst_56 : f32 to vector<2x128xf32>
    %306 = arith.addf %305, %304 : vector<2x128xf32>
    %307 = arith.divf %305, %306 : vector<2x128xf32>
    %308 = math.tanh %302 : vector<2x128xf32>
    %309 = vector.extract_strided_slice %307 {offsets = [0, 0], sizes = [2, 32], strides = [1, 1]} : vector<2x128xf32> to vector<2x32xf32>
    %310 = vector.extract_strided_slice %307 {offsets = [0, 32], sizes = [2, 32], strides = [1, 1]} : vector<2x128xf32> to vector<2x32xf32>
    %311 = vector.extract_strided_slice %308 {offsets = [0, 64], sizes = [2, 32], strides = [1, 1]} : vector<2x128xf32> to vector<2x32xf32>
    %312 = vector.extract_strided_slice %307 {offsets = [0, 96], sizes = [2, 32], strides = [1, 1]} : vector<2x128xf32> to vector<2x32xf32>
    %313 = arith.mulf %310, %295 : vector<2x32xf32>
    %314 = arith.mulf %309, %311 : vector<2x32xf32>
    %315 = arith.addf %313, %314 : vector<2x32xf32>
    %316 = math.tanh %315 : vector<2x32xf32>
    %317 = arith.mulf %312, %316 : vector<2x32xf32>
    %c0_57 = arith.constant 0 : index
    %c0_58 = arith.constant 0 : index
    %318 = vector.load %arg7[%c0_57, %c0_58] : memref<32x4xf32, #tpu.memory_space<vmem>>, vector<32x4xf32>
    %cst_59 = arith.constant dense<0.000000e+00> : vector<2x4xf32>
    %319 = tpu.matmul %317, %318, %cst_59 {dimension_numbers = #tpu.dot_dimension_numbers<[1], [0], [0], [1], [0, 0, 1, 1], [], []>} : vector<2x32xf32>, vector<32x4xf32>, vector<2x4xf32> -> vector<2x4xf32>
    %c0_60 = arith.constant 0 : index
    %c0_61 = arith.constant 0 : index
    %320 = vector.load %arg8[%c0_60, %c0_61] : memref<1x4xf32, #tpu.memory_space<vmem>>, vector<1x4xf32>
    %321 = vector.broadcast %320 : vector<1x4xf32> to vector<2x4xf32>
    %322 = arith.addf %319, %321 : vector<2x4xf32>
    %c0_62 = arith.constant 0 : index
    %c0_63 = arith.constant 0 : index
    %323 = vector.load %arg9[%c0_62, %c0_63] : memref<2x4xf32, #tpu.memory_space<vmem>>, vector<2x4xf32>
    tpu.vector_store %arg9[%c0_62, %c0_63], %322 {strides = array<i32>} : memref<2x4xf32, #tpu.memory_space<vmem>>, vector<2x4xf32>,
    return
  }
}

</mosaic_0001>

<llo_original>
// kernel: lstm_model_forward.1
$region0: #{lstm_model_forward.1}
  #allocation0 [shape = 'u32[]', space=smem, size = 0x4, offset = 0x4, fixed_abs, tag = 'smem constant byte address 0x4 - core index']
  #allocation1 [shape = 'u32[144,128]{1,0:T(1,128)}', space=vmem, size = 0x12000, scoped, tag = 'internal scratch']
  %s0 = inlined_call_operand.vmem [shape: f32[16,8], index: 0, kind: input, shape index: {}]
  %s1 = inlined_call_operand.hbm [shape: f32[8,128], index: 1, kind: input, shape index: {}]
  %s2 = inlined_call_operand.vmem [shape: f32[32,128], index: 2, kind: input, shape index: {}]
  %s3 = inlined_call_operand.vmem [shape: f32[1,128], index: 3, kind: input, shape index: {}]
  %s4 = inlined_call_operand.vmem [shape: f32[32,128], index: 4, kind: input, shape index: {}]
  %s5 = inlined_call_operand.vmem [shape: f32[32,128], index: 5, kind: input, shape index: {}]
  %s6 = inlined_call_operand.vmem [shape: f32[1,128], index: 6, kind: input, shape index: {}]
  %s7 = inlined_call_operand.vmem [shape: f32[32,4], index: 7, kind: input, shape index: {}]
  %s8 = inlined_call_operand.hbm [shape: f32[1,4], index: 8, kind: input, shape index: {}]
  %s9 = inlined_call_operand.hbm [shape: f32[2,4], index: 9, kind: output, shape index: {}]
  %s10 = sld [smem:[#allocation0]]
  $region54: #{lstm_model_forward.1} parent=0
    _
  %s12 = ssub.s32 1, %s10
  %s13 = scalar_select 0, %s12, %s10
  $region1: #{lstm_model_forward.1} parent=0
    #allocation2 [shape = 'u8[4096]{0}', space=vmem, size = 0x1000, scoped, tag = 'input window, operand 1, single buffered']
    #allocation3 [shape = 's32[1]{0}', space=sflag, size = 0x4, scoped, tag = 'scoped memory for lstm_model_forward.1']
    #allocation4 [shape = 's32[1]{0}', space=sflag, size = 0x4, scoped, tag = 'scoped memory for lstm_model_forward.1']
    #allocation5 [shape = 'u8[512]{0}', space=vmem, size = 0x400, scoped, tag = 'input window, operand 8, single buffered']
    #allocation6 [shape = 's32[1]{0}', space=sflag, size = 0x4, scoped, tag = 'scoped memory for lstm_model_forward.1']
    #allocation7 [shape = 'u8[1024]{0}', space=vmem, size = 0x400, scoped, tag = 'output window, operand 0, single buffered']
    %14 = vsyncpa [#allocation3], 0
    %15 = vsyncpa [#allocation6], 0
    %16 = vsyncpa [#allocation4], 0
    // Predicated region
    $region2: #{lstm_model_forward.1} parent=1 // pred_check
      _
    $region3: #{lstm_model_forward.1} parent=1 // pred_check_branch
      %18 = sbr.rel (0) target = $region5
    $region4: #{lstm_model_forward.1} parent=1 // pred_region
      _
    $region5: #{lstm_model_forward.1} parent=1 // pred_fallthru
      _
    // Predicated region
    $region6: #{lstm_model_forward.1} parent=1 // pred_check
      _
    $region7: #{lstm_model_forward.1} parent=1 // pred_check_branch
      %20 = sbr.rel (0) target = $region9
    $region8: #{lstm_model_forward.1} parent=1 // pred_region
      %s22 = ssub.s32 128, 128
      %23 = vsyncadd [#allocation3], %s22
      %s25 = sshll.u32 [#allocation2], 4
      %s26 = int_to_ptr.vmem [resolvable:$true] %s25
      %28 = dma.hbm_to_vmem [thread:$0]  %s1, 128, %s26, [#allocation3]
    $region9: #{lstm_model_forward.1} parent=1 // pred_fallthru
      _
    // Predicated region
    $region10: #{lstm_model_forward.1} parent=1 // pred_check
      _
    $region11: #{lstm_model_forward.1} parent=1 // pred_check_branch
      %30 = sbr.rel (0) target = $region13
    $region12: #{lstm_model_forward.1} parent=1 // pred_region
      _
    $region13: #{lstm_model_forward.1} parent=1 // pred_fallthru
      _
    // Predicated region
    $region14: #{lstm_model_forward.1} parent=1 // pred_check
      _
    $region15: #{lstm_model_forward.1} parent=1 // pred_check_branch
      %32 = sbr.rel (0) target = $region17
    $region16: #{lstm_model_forward.1} parent=1 // pred_region
      _
    $region17: #{lstm_model_forward.1} parent=1 // pred_fallthru
      _
    // Predicated region
    $region18: #{lstm_model_forward.1} parent=1 // pred_check
      _
    $region19: #{lstm_model_forward.1} parent=1 // pred_check_branch
      %34 = sbr.rel (0) target = $region21
    $region20: #{lstm_model_forward.1} parent=1 // pred_region
      _
    $region21: #{lstm_model_forward.1} parent=1 // pred_fallthru
      _
    // Predicated region
    $region22: #{lstm_model_forward.1} parent=1 // pred_check
      _
    $region23: #{lstm_model_forward.1} parent=1 // pred_check_branch
      %36 = sbr.rel (0) target = $region25
    $region24: #{lstm_model_forward.1} parent=1 // pred_region
      _
    $region25: #{lstm_model_forward.1} parent=1 // pred_fallthru
      _
    // Predicated region
    $region26: #{lstm_model_forward.1} parent=1 // pred_check
      _
    $region27: #{lstm_model_forward.1} parent=1 // pred_check_branch
      %38 = sbr.rel (0) target = $region29
    $region28: #{lstm_model_forward.1} parent=1 // pred_region
      _
    $region29: #{lstm_model_forward.1} parent=1 // pred_fallthru
      _
    // Predicated region
    $region30: #{lstm_model_forward.1} parent=1 // pred_check
      _
    $region31: #{lstm_model_forward.1} parent=1 // pred_check_branch
      %40 = sbr.rel (0) target = $region33
    $region32: #{lstm_model_forward.1} parent=1 // pred_region
      _
    $region33: #{lstm_model_forward.1} parent=1 // pred_fallthru
      _
    // Predicated region
    $region34: #{lstm_model_forward.1} parent=1 // pred_check
      _
    $region35: #{lstm_model_forward.1} parent=1 // pred_check_branch
      %42 = sbr.rel (0) target = $region37
    $region36: #{lstm_model_forward.1} parent=1 // pred_region
      %s44 = ssub.s32 16, 16
      %45 = vsyncadd [#allocation6], %s44
      %s47 = sshll.u32 [#allocation5], 4
      %s48 = int_to_ptr.vmem [resolvable:$true] %s47
      %50 = dma.hbm_to_vmem [thread:$0]  %s8, 16, %s48, [#allocation6]
    $region37: #{lstm_model_forward.1} parent=1 // pred_fallthru
      _
    // Predicated region
    $region38: #{lstm_model_forward.1} parent=1 // pred_check
      _
    $region39: #{lstm_model_forward.1} parent=1 // pred_check_branch
      %52 = sbr.rel (0) target = $region41
    $region40: #{lstm_model_forward.1} parent=1 // pred_region
      %53 = dma.done [#allocation3], 128
    $region41: #{lstm_model_forward.1} parent=1 // pred_fallthru
      _
    // Predicated region
    $region42: #{lstm_model_forward.1} parent=1 // pred_check
      _
    $region43: #{lstm_model_forward.1} parent=1 // pred_check_branch
      %55 = sbr.rel (0) target = $region45
    $region44: #{lstm_model_forward.1} parent=1 // pred_region
      %56 = dma.done [#allocation6], 16
    $region45: #{lstm_model_forward.1} parent=1 // pred_fallthru
      _
    %v57 = vld [vmem:[%s0] sm:$0xff]
    %v58 = vld [vmem:[%s0 + $0x8] sm:$0xff]
    %v59 = vld [vmem:[#allocation2] sm:$0xff]
    %v60 = vld [vmem:[%s4] sm:$0xff]
    %v61 = vld [vmem:[%s4 + $0x8] sm:$0xff]
    %v62 = vld [vmem:[%s4 + $0x10] sm:$0xff]
    %v63 = vld [vmem:[%s4 + $0x18] sm:$0xff]
    %v64 = vld [vmem:[%s2] sm:$0xff]
    %v65 = vld [vmem:[%s2 + $0x8] sm:$0xff]
    %v66 = vld [vmem:[%s2 + $0x10] sm:$0xff]
    %v67 = vld [vmem:[%s2 + $0x18] sm:$0xff]
    %v68 = vld [vmem:[%s5] sm:$0xff]
    %v69 = vld [vmem:[%s5 + $0x8] sm:$0xff]
    %v70 = vld [vmem:[%s5 + $0x10] sm:$0xff]
    %v71 = vld [vmem:[%s5 + $0x18] sm:$0xff]
    %v72 = vld [vmem:[%s3] sm:$0x1]
    %v73 = vld [vmem:[%s6] sm:$0x1]
    %v75 = vlaneseq
    %v76 = vshrl.u32 %v75, 7
    %v77 = vsub.s32 0, %v76
    %v78 = vrot.slane %v72, %v77
    %vm80 = vcmask 64512
    %v82 = vsel %vm80, %v57, 0
    %v85 = vsel %vm80, %v58, 0
    %87 = vmatprep.subr.mxu0 0.0
    %88 = vmatpush1.msra.mxu0 %v59
    %89 = vmatprep.subr.mxu0 0.0
    %90 = vmatpush1.msra.mxu0 0.0
    %91 = vmatprep.subr.mxu0 0.0
    %92 = vmatpush1.msra.mxu0 0.0
    %93 = vmatprep.subr.mxu0 0.0
    %94 = vmatpush1.msra.mxu0 0.0
    %95 = vmatprep.subr.mxu0 0.0
    %96 = vmatpush1.msra.mxu0 0.0
    %97 = vmatprep.subr.mxu0 0.0
    %98 = vmatpush1.msra.mxu0 0.0
    %99 = vmatprep.subr.mxu0 0.0
    %100 = vmatpush1.msra.mxu0 0.0
    %101 = vmatprep.subr.mxu0 0.0
    %102 = vmatpush1.msra.mxu0 0.0
    %103 = vmatprep.subr.mxu0 0.0
    %104 = vmatpush1.msra.mxu0 0.0
    %105 = vmatprep.subr.mxu0 0.0
    %106 = vmatpush1.msra.mxu0 0.0
    %107 = vmatprep.subr.mxu0 0.0
    %108 = vmatpush1.msra.mxu0 0.0
    %109 = vmatprep.subr.mxu0 0.0
    %110 = vmatpush1.msra.mxu0 0.0
    %111 = vmatprep.subr.mxu0 0.0
    %112 = vmatpush1.msra.mxu0 0.0
    %113 = vmatprep.subr.mxu0 0.0
    %114 = vmatpush1.msra.mxu0 0.0
    %115 = vmatprep.subr.mxu0 0.0
    %116 = vmatpush1.msra.mxu0 0.0
    %117 = vmatprep.subr.mxu0 0.0
    %118 = vmatpush1.msra.mxu0 0.0
    %119 = vmatprep.subr.mxu0 0.0
    %120 = vmatpush1.msra.mxu0 0.0
    %121 = vmatprep.subr.mxu0 0.0
    %122 = vmatpush1.msra.mxu0 0.0
    %123 = vmatprep.subr.mxu0 0.0
    %124 = vmatpush1.msra.mxu0 0.0
    %125 = vmatprep.subr.mxu0 0.0
    %126 = vmatpush1.msra.mxu0 0.0
    %127 = vmatprep.subr.mxu0 0.0
    %128 = vmatpush1.msra.mxu0 0.0
    %129 = vmatprep.subr.mxu0 0.0
    %130 = vmatpush1.msra.mxu0 0.0
    %131 = vmatprep.subr.mxu0 0.0
    %132 = vmatpush1.msra.mxu0 0.0
    %133 = vmatprep.subr.mxu0 0.0
    %134 = vmatpush1.msra.mxu0 0.0
    %135 = vmatprep.subr.mxu0 0.0
    %136 = vmatpush1.msra.mxu0 0.0
    %137 = vmatprep.subr.mxu0 0.0
    %138 = vmatpush1.msra.mxu0 0.0
    %139 = vmatprep.subr.mxu0 0.0
    %140 = vmatpush1.msra.mxu0 0.0
    %141 = vmatprep.subr.mxu0 0.0
    %142 = vmatpush1.msra.mxu0 0.0
    %143 = vmatprep.subr.mxu0 0.0
    %144 = vmatpush1.msra.mxu0 0.0
    %145 = vmatprep.subr.mxu0 0.0
    %146 = vmatpush1.msra.mxu0 0.0
    %147 = vmatprep.subr.mxu0 0.0
    %148 = vmatpush1.msra.mxu0 0.0
    %149 = vmatprep.subr.mxu0 0.0
    %150 = vmatpush1.msra.mxu0 0.0
    %151 = vmatprep.mubr.f32.mxu0 0.0
    %152 = vmatmul.mubr.f32.gmra.mrb[0].mxu0 %v82
    %v153 = vpop.f32.mrb[0].mxu0
    %v154 = vadd.f32 %v78, %v153
    %v155 = vpop.f32.mrb[0].mxu0
    %156 = vmatprep.mubr.f32.mxu0 0.0
    %157 = vmatmul.mubr.f32.gmra.mrb[0].mxu0 %v85
    %v158 = vpop.f32.mrb[0].mxu0
    %v159 = vadd.f32 %v78, %v158
    %v160 = vpop.f32.mrb[0].mxu0
    %161 = vdwg.mxu0
    %vm162 = vcmask 261120
    %v164 = vsel %vm162, 0.0, 0
    %166 = vmatprep.subr.mxu0 0.0
    %167 = vmatpush1.msra.mxu0 %v64
    %168 = vmatprep.subr.mxu0 0.0
    %169 = vmatpush1.msra.mxu0 %v65
    %170 = vmatprep.subr.mxu0 0.0
    %171 = vmatpush1.msra.mxu0 %v66
    %172 = vmatprep.subr.mxu0 0.0
    %173 = vmatpush1.msra.mxu0 %v67
    %174 = vmatprep.subr.mxu0 0.0
    %175 = vmatpush1.msra.mxu0 0.0
    %176 = vmatprep.subr.mxu0 0.0
    %177 = vmatpush1.msra.mxu0 0.0
    %178 = vmatprep.subr.mxu0 0.0
    %179 = vmatpush1.msra.mxu0 0.0
    %180 = vmatprep.subr.mxu0 0.0
    %181 = vmatpush1.msra.mxu0 0.0
    %182 = vmatprep.subr.mxu0 0.0
    %183 = vmatpush1.msra.mxu0 0.0
    %184 = vmatprep.subr.mxu0 0.0
    %185 = vmatpush1.msra.mxu0 0.0
    %186 = vmatprep.subr.mxu0 0.0
    %187 = vmatpush1.msra.mxu0 0.0
    %188 = vmatprep.subr.mxu0 0.0
    %189 = vmatpush1.msra.mxu0 0.0
    %190 = vmatprep.subr.mxu0 0.0
    %191 = vmatpush1.msra.mxu0 0.0
    %192 = vmatprep.subr.mxu0 0.0
    %193 = vmatpush1.msra.mxu0 0.0
    %194 = vmatprep.subr.mxu0 0.0
    %195 = vmatpush1.msra.mxu0 0.0
    %196 = vmatprep.subr.mxu0 0.0
    %197 = vmatpush1.msra.mxu0 0.0
    %198 = vmatprep.subr.mxu0 0.0
    %199 = vmatpush1.msra.mxu0 0.0
    %200 = vmatprep.subr.mxu0 0.0
    %201 = vmatpush1.msra.mxu0 0.0
    %202 = vmatprep.subr.mxu0 0.0
    %203 = vmatpush1.msra.mxu0 0.0
    %204 = vmatprep.subr.mxu0 0.0
    %205 = vmatpush1.msra.mxu0 0.0
    %206 = vmatprep.subr.mxu0 0.0
    %207 = vmatpush1.msra.mxu0 0.0
    %208 = vmatprep.subr.mxu0 0.0
    %209 = vmatpush1.msra.mxu0 0.0
    %210 = vmatprep.subr.mxu0 0.0
    %211 = vmatpush1.msra.mxu0 0.0
    %212 = vmatprep.subr.mxu0 0.0
    %213 = vmatpush1.msra.mxu0 0.0
    %214 = vmatprep.subr.mxu0 0.0
    %215 = vmatpush1.msra.mxu0 0.0
    %216 = vmatprep.subr.mxu0 0.0
    %217 = vmatpush1.msra.mxu0 0.0
    %218 = vmatprep.subr.mxu0 0.0
    %219 = vmatpush1.msra.mxu0 0.0
    %220 = vmatprep.subr.mxu0 0.0
    %221 = vmatpush1.msra.mxu0 0.0
    %222 = vmatprep.subr.mxu0 0.0
    %223 = vmatpush1.msra.mxu0 0.0
    %224 = vmatprep.subr.mxu0 0.0
    %225 = vmatpush1.msra.mxu0 0.0
    %226 = vmatprep.subr.mxu0 0.0
    %227 = vmatpush1.msra.mxu0 0.0
    %228 = vmatprep.subr.mxu0 0.0
    %229 = vmatpush1.msra.mxu0 0.0
    %230 = vmatprep.mubr.f32.mxu0 0.0
    %231 = vmatmul.mubr.f32.gmra.mrb[0].mxu0 %v164
    %v232 = vpop.f32.mrb[0].mxu0
    %v233 = vadd.f32 0.0, %v232
    %v234 = vpop.f32.mrb[0].mxu0
    %235 = vdwg.mxu0
    %v236 = vadd.f32 %v154, %v233
    %v237 = vxor.u32 %v236, 2147483648
    %v238 = vmul.f32 %v237, 1.442695
    %v239 = vpow.pop %v238
    %v240 = vadd.f32 %v239, 1.0
    %v241 = vrcp.pop %v240
    %v242 = vmul.f32 1.0, %v241
    %v243 = vtanh.pop %v236
    %v244 = vmul.f32 %v242, 0.0
    %246 = vrot.lane.b32.xlu0 %v243, 64
    %v247 = vpop.permute.xlu0 %246
    %v249 = vmul.f32 %v242, %v247
    %251 = vrot.lane.b32.xlu0 %v249, 32
    %v252 = vpop.permute.xlu0 %251
    %v254 = vadd.f32 %v244, %v252
    %v255 = vtanh.pop %v254
    %257 = vrot.lane.b32.xlu0 %v255, 64
    %v258 = vpop.permute.xlu0 %257
    %v260 = vmul.f32 %v242, %v258
    %262 = vrot.lane.b32.xlu0 %v260, 32
    %v263 = vpop.permute.xlu0 %262
    %v264 = vsel %vm162, %v263, 0
    %266 = vmatprep.subr.mxu0 0.0
    %267 = vmatpush1.msra.mxu0 %v64
    %268 = vmatprep.subr.mxu0 0.0
    %269 = vmatpush1.msra.mxu0 %v65
    %270 = vmatprep.subr.mxu0 0.0
    %271 = vmatpush1.msra.mxu0 %v66
    %272 = vmatprep.subr.mxu0 0.0
    %273 = vmatpush1.msra.mxu0 %v67
    %274 = vmatprep.subr.mxu0 0.0
    %275 = vmatpush1.msra.mxu0 0.0
    %276 = vmatprep.subr.mxu0 0.0
    %277 = vmatpush1.msra.mxu0 0.0
    %278 = vmatprep.subr.mxu0 0.0
    %279 = vmatpush1.msra.mxu0 0.0
    %280 = vmatprep.subr.mxu0 0.0
    %281 = vmatpush1.msra.mxu0 0.0
    %282 = vmatprep.subr.mxu0 0.0
    %283 = vmatpush1.msra.mxu0 0.0
    %284 = vmatprep.subr.mxu0 0.0
    %285 = vmatpush1.msra.mxu0 0.0
    %286 = vmatprep.subr.mxu0 0.0
    %287 = vmatpush1.msra.mxu0 0.0
    %288 = vmatprep.subr.mxu0 0.0
    %289 = vmatpush1.msra.mxu0 0.0
    %290 = vmatprep.subr.mxu0 0.0
    %291 = vmatpush1.msra.mxu0 0.0
    %292 = vmatprep.subr.mxu0 0.0
    %293 = vmatpush1.msra.mxu0 0.0
    %294 = vmatprep.subr.mxu0 0.0
    %295 = vmatpush1.msra.mxu0 0.0
    %296 = vmatprep.subr.mxu0 0.0
    %297 = vmatpush1.msra.mxu0 0.0
    %298 = vmatprep.subr.mxu0 0.0
    %299 = vmatpush1.msra.mxu0 0.0
    %300 = vmatprep.subr.mxu0 0.0
    %301 = vmatpush1.msra.mxu0 0.0
    %302 = vmatprep.subr.mxu0 0.0
    %303 = vmatpush1.msra.mxu0 0.0
    %304 = vmatprep.subr.mxu0 0.0
    %305 = vmatpush1.msra.mxu0 0.0
    %306 = vmatprep.subr.mxu0 0.0
    %307 = vmatpush1.msra.mxu0 0.0
    %308 = vmatprep.subr.mxu0 0.0
    %309 = vmatpush1.msra.mxu0 0.0
    %310 = vmatprep.subr.mxu0 0.0
    %311 = vmatpush1.msra.mxu0 0.0
    %312 = vmatprep.subr.mxu0 0.0
    %313 = vmatpush1.msra.mxu0 0.0
    %314 = vmatprep.subr.mxu0 0.0
    %315 = vmatpush1.msra.mxu0 0.0
    %316 = vmatprep.subr.mxu0 0.0
    %317 = vmatpush1.msra.mxu0 0.0
    %318 = vmatprep.subr.mxu0 0.0
    %319 = vmatpush1.msra.mxu0 0.0
    %320 = vmatprep.subr.mxu0 0.0
    %321 = vmatpush1.msra.mxu0 0.0
    %322 = vmatprep.subr.mxu0 0.0
    %323 = vmatpush1.msra.mxu0 0.0
    %324 = vmatprep.subr.mxu0 0.0
    %325 = vmatpush1.msra.mxu0 0.0
    %326 = vmatprep.subr.mxu0 0.0
    %327 = vmatpush1.msra.mxu0 0.0
    %328 = vmatprep.subr.mxu0 0.0
    %329 = vmatpush1.msra.mxu0 0.0
    %330 = vmatprep.mubr.f32.mxu0 0.0
    %331 = vmatmul.mubr.f32.gmra.mrb[0].mxu0 %v264
    %v332 = vpop.f32.mrb[0].mxu0
    %v333 = vadd.f32 0.0, %v332
    %v334 = vpop.f32.mrb[0].mxu0
    %335 = vdwg.mxu0
    %v337 = vrot.slane %v333, 6
    %v339 = vadd.f32 %v154, %v337
    %v340 = vxor.u32 %v339, 2147483648
    %v341 = vmul.f32 %v340, 1.442695
    %v342 = vpow.pop %v341
    %v343 = vadd.f32 %v342, 1.0
    %v344 = vrcp.pop %v343
    %v345 = vmul.f32 1.0, %v344
    %v346 = vtanh.pop %v339
    %v348 = vrot.slane %v254, 6
    %v350 = vmul.f32 %v345, %v348
    %352 = vrot.lane.b32.xlu0 %v346, 64
    %v353 = vpop.permute.xlu0 %352
    %v355 = vmul.f32 %v345, %v353
    %357 = vrot.lane.b32.xlu0 %v355, 32
    %v358 = vpop.permute.xlu0 %357
    %v360 = vadd.f32 %v350, %v358
    %v361 = vtanh.pop %v360
    %363 = vrot.lane.b32.xlu0 %v361, 64
    %v364 = vpop.permute.xlu0 %363
    %v366 = vmul.f32 %v345, %v364
    %367 = vmatprep.subr.mxu0 0.0
    %368 = vmatpush1.msra.mxu0 %v68
    %369 = vmatprep.subr.mxu0 0.0
    %370 = vmatpush1.msra.mxu0 %v69
    %371 = vmatprep.subr.mxu0 0.0
    %372 = vmatpush1.msra.mxu0 %v70
    %373 = vmatprep.subr.mxu0 0.0
    %374 = vmatpush1.msra.mxu0 %v71
    %375 = vmatprep.subr.mxu0 0.0
    %376 = vmatpush1.msra.mxu0 0.0
    %377 = vmatprep.subr.mxu0 0.0
    %378 = vmatpush1.msra.mxu0 0.0
    %379 = vmatprep.subr.mxu0 0.0
    %380 = vmatpush1.msra.mxu0 0.0
    %381 = vmatprep.subr.mxu0 0.0
    %382 = vmatpush1.msra.mxu0 0.0
    %383 = vmatprep.subr.mxu0 0.0
    %384 = vmatpush1.msra.mxu0 0.0
    %385 = vmatprep.subr.mxu0 0.0
    %386 = vmatpush1.msra.mxu0 0.0
    %387 = vmatprep.subr.mxu0 0.0
    %388 = vmatpush1.msra.mxu0 0.0
    %389 = vmatprep.subr.mxu0 0.0
    %390 = vmatpush1.msra.mxu0 0.0
    %391 = vmatprep.subr.mxu0 0.0
    %392 = vmatpush1.msra.mxu0 0.0
    %393 = vmatprep.subr.mxu0 0.0
    %394 = vmatpush1.msra.mxu0 0.0
    %395 = vmatprep.subr.mxu0 0.0
    %396 = vmatpush1.msra.mxu0 0.0
    %397 = vmatprep.subr.mxu0 0.0
    %398 = vmatpush1.msra.mxu0 0.0
    %399 = vmatprep.subr.mxu0 0.0
    %400 = vmatpush1.msra.mxu0 0.0
    %401 = vmatprep.subr.mxu0 0.0
    %402 = vmatpush1.msra.mxu0 0.0
    %403 = vmatprep.subr.mxu0 0.0
    %404 = vmatpush1.msra.mxu0 0.0
    %405 = vmatprep.subr.mxu0 0.0
    %406 = vmatpush1.msra.mxu0 0.0
    %407 = vmatprep.subr.mxu0 0.0
    %408 = vmatpush1.msra.mxu0 0.0
    %409 = vmatprep.subr.mxu0 0.0
    %410 = vmatpush1.msra.mxu0 0.0
    %411 = vmatprep.subr.mxu0 0.0
    %412 = vmatpush1.msra.mxu0 0.0
    %413 = vmatprep.subr.mxu0 0.0
    %414 = vmatpush1.msra.mxu0 0.0
    %415 = vmatprep.subr.mxu0 0.0
    %416 = vmatpush1.msra.mxu0 0.0
    %417 = vmatprep.subr.mxu0 0.0
    %418 = vmatpush1.msra.mxu0 0.0
    %419 = vmatprep.subr.mxu0 0.0
    %420 = vmatpush1.msra.mxu0 0.0
    %421 = vmatprep.subr.mxu0 0.0
    %422 = vmatpush1.msra.mxu0 0.0
    %423 = vmatprep.subr.mxu0 0.0
    %424 = vmatpush1.msra.mxu0 0.0
    %425 = vmatprep.subr.mxu0 0.0
    %426 = vmatpush1.msra.mxu0 0.0
    %427 = vmatprep.subr.mxu0 0.0
    %428 = vmatpush1.msra.mxu0 0.0
    %429 = vmatprep.subr.mxu0 0.0
    %430 = vmatpush1.msra.mxu0 0.0
    %431 = vmatprep.mubr.f32.mxu0 0.0
    %432 = vmatmul.mubr.f32.gmra.mrb[0].mxu0 %v164
    %v433 = vpop.f32.mrb[0].mxu0
    %v434 = vadd.f32 0.0, %v433
    %v435 = vpop.f32.mrb[0].mxu0
    %436 = vdwg.mxu0
    %437 = vmatprep.subr.mxu0 0.0
    %438 = vmatpush1.msra.mxu0 %v60
    %439 = vmatprep.subr.mxu0 0.0
    %440 = vmatpush1.msra.mxu0 %v61
    %441 = vmatprep.subr.mxu0 0.0
    %442 = vmatpush1.msra.mxu0 %v62
    %443 = vmatprep.subr.mxu0 0.0
    %444 = vmatpush1.msra.mxu0 %v63
    %445 = vmatprep.subr.mxu0 0.0
    %446 = vmatpush1.msra.mxu0 0.0
    %447 = vmatprep.subr.mxu0 0.0
    %448 = vmatpush1.msra.mxu0 0.0
    %449 = vmatprep.subr.mxu0 0.0
    %450 = vmatpush1.msra.mxu0 0.0
    %451 = vmatprep.subr.mxu0 0.0
    %452 = vmatpush1.msra.mxu0 0.0
    %453 = vmatprep.subr.mxu0 0.0
    %454 = vmatpush1.msra.mxu0 0.0
    %455 = vmatprep.subr.mxu0 0.0
    %456 = vmatpush1.msra.mxu0 0.0
    %457 = vmatprep.subr.mxu0 0.0
    %458 = vmatpush1.msra.mxu0 0.0
    %459 = vmatprep.subr.mxu0 0.0
    %460 = vmatpush1.msra.mxu0 0.0
    %461 = vmatprep.subr.mxu0 0.0
    %462 = vmatpush1.msra.mxu0 0.0
    %463 = vmatprep.subr.mxu0 0.0
    %464 = vmatpush1.msra.mxu0 0.0
    %465 = vmatprep.subr.mxu0 0.0
    %466 = vmatpush1.msra.mxu0 0.0
    %467 = vmatprep.subr.mxu0 0.0
    %468 = vmatpush1.msra.mxu0 0.0
    %469 = vmatprep.subr.mxu0 0.0
    %470 = vmatpush1.msra.mxu0 0.0
    %471 = vmatprep.subr.mxu0 0.0
    %472 = vmatpush1.msra.mxu0 0.0
    %473 = vmatprep.subr.mxu0 0.0
    %474 = vmatpush1.msra.mxu0 0.0
    %475 = vmatprep.subr.mxu0 0.0
    %476 = vmatpush1.msra.mxu0 0.0
    %477 = vmatprep.subr.mxu0 0.0
    %478 = vmatpush1.msra.mxu0 0.0
    %479 = vmatprep.subr.mxu0 0.0
    %480 = vmatpush1.msra.mxu0 0.0
    %481 = vmatprep.subr.mxu0 0.0
    %482 = vmatpush1.msra.mxu0 0.0
    %483 = vmatprep.subr.mxu0 0.0
    %484 = vmatpush1.msra.mxu0 0.0
    %485 = vmatprep.subr.mxu0 0.0
    %486 = vmatpush1.msra.mxu0 0.0
    %487 = vmatprep.subr.mxu0 0.0
    %488 = vmatpush1.msra.mxu0 0.0
    %489 = vmatprep.subr.mxu0 0.0
    %490 = vmatpush1.msra.mxu0 0.0
    %491 = vmatprep.subr.mxu0 0.0
    %492 = vmatpush1.msra.mxu0 0.0
    %493 = vmatprep.subr.mxu0 0.0
    %494 = vmatpush1.msra.mxu0 0.0
    %495 = vmatprep.subr.mxu0 0.0
    %496 = vmatpush1.msra.mxu0 0.0
    %497 = vmatprep.subr.mxu0 0.0
    %498 = vmatpush1.msra.mxu0 0.0
    %499 = vmatprep.subr.mxu0 0.0
    %500 = vmatpush1.msra.mxu0 0.0
    %501 = vmatprep.mubr.f32.mxu0 0.0
    %502 = vmatmul.mubr.f32.gmra.mrb[0].mxu0 %v264
    %v503 = vpop.f32.mrb[0].mxu0
    %v504 = vadd.f32 %v434, %v503
    %v505 = vpop.f32.mrb[0].mxu0
    %506 = vdwg.mxu0
    %v508 = vlaneseq
    %v509 = vshrl.u32 %v508, 7
    %v510 = vsub.s32 0, %v509
    %v511 = vrot.slane %v73, %v510
    %v513 = vadd.f32 %v504, %v511
    %v514 = vxor.u32 %v513, 2147483648
    %v515 = vmul.f32 %v514, 1.442695
    %v516 = vpow.pop %v515
    %v517 = vadd.f32 %v516, 1.0
    %v518 = vrcp.pop %v517
    %v519 = vmul.f32 1.0, %v518
    %v520 = vtanh.pop %v513
    %v521 = vmul.f32 %v519, 0.0
    %523 = vrot.lane.b32.xlu0 %v520, 64
    %v524 = vpop.permute.xlu0 %523
    %v526 = vmul.f32 %v519, %v524
    %528 = vrot.lane.b32.xlu0 %v526, 32
    %v529 = vpop.permute.xlu0 %528
    %v531 = vadd.f32 %v521, %v529
    %v532 = vtanh.pop %v531
    %534 = vrot.lane.b32.xlu0 %v532, 64
    %v535 = vpop.permute.xlu0 %534
    %v537 = vmul.f32 %v519, %v535
    %v539 = vrot.slane %v366, 2
    %540 = vrot.lane.b32.xlu0 %v539, 32
    %v541 = vpop.permute.xlu0 %540
    %v542 = vsel %vm162, %v541, 0
    %544 = vmatprep.subr.mxu0 0.0
    %545 = vmatpush1.msra.mxu0 %v64
    %546 = vmatprep.subr.mxu0 0.0
    %547 = vmatpush1.msra.mxu0 %v65
    %548 = vmatprep.subr.mxu0 0.0
    %549 = vmatpush1.msra.mxu0 %v66
    %550 = vmatprep.subr.mxu0 0.0
    %551 = vmatpush1.msra.mxu0 %v67
    %552 = vmatprep.subr.mxu0 0.0
    %553 = vmatpush1.msra.mxu0 0.0
    %554 = vmatprep.subr.mxu0 0.0
    %555 = vmatpush1.msra.mxu0 0.0
    %556 = vmatprep.subr.mxu0 0.0
    %557 = vmatpush1.msra.mxu0 0.0
    %558 = vmatprep.subr.mxu0 0.0
    %559 = vmatpush1.msra.mxu0 0.0
    %560 = vmatprep.subr.mxu0 0.0
    %561 = vmatpush1.msra.mxu0 0.0
    %562 = vmatprep.subr.mxu0 0.0
    %563 = vmatpush1.msra.mxu0 0.0
    %564 = vmatprep.subr.mxu0 0.0
    %565 = vmatpush1.msra.mxu0 0.0
    %566 = vmatprep.subr.mxu0 0.0
    %567 = vmatpush1.msra.mxu0 0.0
    %568 = vmatprep.subr.mxu0 0.0
    %569 = vmatpush1.msra.mxu0 0.0
    %570 = vmatprep.subr.mxu0 0.0
    %571 = vmatpush1.msra.mxu0 0.0
    %572 = vmatprep.subr.mxu0 0.0
    %573 = vmatpush1.msra.mxu0 0.0
    %574 = vmatprep.subr.mxu0 0.0
    %575 = vmatpush1.msra.mxu0 0.0
    %576 = vmatprep.subr.mxu0 0.0
    %577 = vmatpush1.msra.mxu0 0.0
    %578 = vmatprep.subr.mxu0 0.0
    %579 = vmatpush1.msra.mxu0 0.0
    %580 = vmatprep.subr.mxu0 0.0
    %581 = vmatpush1.msra.mxu0 0.0
    %582 = vmatprep.subr.mxu0 0.0
    %583 = vmatpush1.msra.mxu0 0.0
    %584 = vmatprep.subr.mxu0 0.0
    %585 = vmatpush1.msra.mxu0 0.0
    %586 = vmatprep.subr.mxu0 0.0
    %587 = vmatpush1.msra.mxu0 0.0
    %588 = vmatprep.subr.mxu0 0.0
    %589 = vmatpush1.msra.mxu0 0.0
    %590 = vmatprep.subr.mxu0 0.0
    %591 = vmatpush1.msra.mxu0 0.0
    %592 = vmatprep.subr.mxu0 0.0
    %593 = vmatpush1.msra.mxu0 0.0
    %594 = vmatprep.subr.mxu0 0.0
    %595 = vmatpush1.msra.mxu0 0.0
    %596 = vmatprep.subr.mxu0 0.0
    %597 = vmatpush1.msra.mxu0 0.0
    %598 = vmatprep.subr.mxu0 0.0
    %599 = vmatpush1.msra.mxu0 0.0
    %600 = vmatprep.subr.mxu0 0.0
    %601 = vmatpush1.msra.mxu0 0.0
    %602 = vmatprep.subr.mxu0 0.0
    %603 = vmatpush1.msra.mxu0 0.0
    %604 = vmatprep.subr.mxu0 0.0
    %605 = vmatpush1.msra.mxu0 0.0
    %606 = vmatprep.subr.mxu0 0.0
    %607 = vmatpush1.msra.mxu0 0.0
    %608 = vmatprep.mubr.f32.mxu0 0.0
    %609 = vmatmul.mubr.f32.gmra.mrb[0].mxu0 %v542
    %v610 = vpop.f32.mrb[0].mxu0
    %v611 = vadd.f32 0.0, %v610
    %v612 = vpop.f32.mrb[0].mxu0
    %613 = vdwg.mxu0
    %v615 = vrot.slane %v611, 4
    %v617 = vadd.f32 %v154, %v615
    %v618 = vxor.u32 %v617, 2147483648
    %v619 = vmul.f32 %v618, 1.442695
    %v620 = vpow.pop %v619
    %v621 = vadd.f32 %v620, 1.0
    %v622 = vrcp.pop %v621
    %v623 = vmul.f32 1.0, %v622
    %v624 = vtanh.pop %v617
    %v626 = vrot.slane %v360, 6
    %v628 = vmul.f32 %v623, %v626
    %630 = vrot.lane.b32.xlu0 %v624, 64
    %v631 = vpop.permute.xlu0 %630
    %v633 = vmul.f32 %v623, %v631
    %635 = vrot.lane.b32.xlu0 %v633, 32
    %v636 = vpop.permute.xlu0 %635
    %v638 = vadd.f32 %v628, %v636
    %v639 = vtanh.pop %v638
    %641 = vrot.lane.b32.xlu0 %v639, 64
    %v642 = vpop.permute.xlu0 %641
    %v644 = vmul.f32 %v623, %v642
    %646 = vrot.lane.b32.xlu0 %v537, 32
    %v647 = vpop.permute.xlu0 %646
    %v648 = vsel %vm162, %v647, 0
    %650 = vmatprep.subr.mxu0 0.0
    %651 = vmatpush1.msra.mxu0 %v68
    %652 = vmatprep.subr.mxu0 0.0
    %653 = vmatpush1.msra.mxu0 %v69
    %654 = vmatprep.subr.mxu0 0.0
    %655 = vmatpush1.msra.mxu0 %v70
    %656 = vmatprep.subr.mxu0 0.0
    %657 = vmatpush1.msra.mxu0 %v71
    %658 = vmatprep.subr.mxu0 0.0
    %659 = vmatpush1.msra.mxu0 0.0
    %660 = vmatprep.subr.mxu0 0.0
    %661 = vmatpush1.msra.mxu0 0.0
    %662 = vmatprep.subr.mxu0 0.0
    %663 = vmatpush1.msra.mxu0 0.0
    %664 = vmatprep.subr.mxu0 0.0
    %665 = vmatpush1.msra.mxu0 0.0
    %666 = vmatprep.subr.mxu0 0.0
    %667 = vmatpush1.msra.mxu0 0.0
    %668 = vmatprep.subr.mxu0 0.0
    %669 = vmatpush1.msra.mxu0 0.0
    %670 = vmatprep.subr.mxu0 0.0
    %671 = vmatpush1.msra.mxu0 0.0
    %672 = vmatprep.subr.mxu0 0.0
    %673 = vmatpush1.msra.mxu0 0.0
    %674 = vmatprep.subr.mxu0 0.0
    %675 = vmatpush1.msra.mxu0 0.0
    %676 = vmatprep.subr.mxu0 0.0
    %677 = vmatpush1.msra.mxu0 0.0
    %678 = vmatprep.subr.mxu0 0.0
    %679 = vmatpush1.msra.mxu0 0.0
    %680 = vmatprep.subr.mxu0 0.0
    %681 = vmatpush1.msra.mxu0 0.0
    %682 = vmatprep.subr.mxu0 0.0
    %683 = vmatpush1.msra.mxu0 0.0
    %684 = vmatprep.subr.mxu0 0.0
    %685 = vmatpush1.msra.mxu0 0.0
    %686 = vmatprep.subr.mxu0 0.0
    %687 = vmatpush1.msra.mxu0 0.0
    %688 = vmatprep.subr.mxu0 0.0
    %689 = vmatpush1.msra.mxu0 0.0
    %690 = vmatprep.subr.mxu0 0.0
    %691 = vmatpush1.msra.mxu0 0.0
    %692 = vmatprep.subr.mxu0 0.0
    %693 = vmatpush1.msra.mxu0 0.0
    %694 = vmatprep.subr.mxu0 0.0
    %695 = vmatpush1.msra.mxu0 0.0
    %696 = vmatprep.subr.mxu0 0.0
    %697 = vmatpush1.msra.mxu0 0.0
    %698 = vmatprep.subr.mxu0 0.0
    %699 = vmatpush1.msra.mxu0 0.0
    %700 = vmatprep.subr.mxu0 0.0
    %701 = vmatpush1.msra.mxu0 0.0
    %702 = vmatprep.subr.mxu0 0.0
    %703 = vmatpush1.msra.mxu0 0.0
    %704 = vmatprep.subr.mxu0 0.0
    %705 = vmatpush1.msra.mxu0 0.0
    %706 = vmatprep.subr.mxu0 0.0
    %707 = vmatpush1.msra.mxu0 0.0
    %708 = vmatprep.subr.mxu0 0.0
    %709 = vmatpush1.msra.mxu0 0.0
    %710 = vmatprep.subr.mxu0 0.0
    %711 = vmatpush1.msra.mxu0 0.0
    %712 = vmatprep.subr.mxu0 0.0
    %713 = vmatpush1.msra.mxu0 0.0
    %714 = vmatprep.mubr.f32.mxu0 0.0
    %715 = vmatmul.mubr.f32.gmra.mrb[0].mxu0 %v648
    %v716 = vpop.f32.mrb[0].mxu0
    %v717 = vadd.f32 0.0, %v716
    %v718 = vpop.f32.mrb[0].mxu0
    %719 = vdwg.mxu0
    %720 = vmatprep.subr.mxu0 0.0
    %721 = vmatpush1.msra.mxu0 %v60
    %722 = vmatprep.subr.mxu0 0.0
    %723 = vmatpush1.msra.mxu0 %v61
    %724 = vmatprep.subr.mxu0 0.0
    %725 = vmatpush1.msra.mxu0 %v62
    %726 = vmatprep.subr.mxu0 0.0
    %727 = vmatpush1.msra.mxu0 %v63
    %728 = vmatprep.subr.mxu0 0.0
    %729 = vmatpush1.msra.mxu0 0.0
    %730 = vmatprep.subr.mxu0 0.0
    %731 = vmatpush1.msra.mxu0 0.0
    %732 = vmatprep.subr.mxu0 0.0
    %733 = vmatpush1.msra.mxu0 0.0
    %734 = vmatprep.subr.mxu0 0.0
    %735 = vmatpush1.msra.mxu0 0.0
    %736 = vmatprep.subr.mxu0 0.0
    %737 = vmatpush1.msra.mxu0 0.0
    %738 = vmatprep.subr.mxu0 0.0
    %739 = vmatpush1.msra.mxu0 0.0
    %740 = vmatprep.subr.mxu0 0.0
    %741 = vmatpush1.msra.mxu0 0.0
    %742 = vmatprep.subr.mxu0 0.0
    %743 = vmatpush1.msra.mxu0 0.0
    %744 = vmatprep.subr.mxu0 0.0
    %745 = vmatpush1.msra.mxu0 0.0
    %746 = vmatprep.subr.mxu0 0.0
    %747 = vmatpush1.msra.mxu0 0.0
    %748 = vmatprep.subr.mxu0 0.0
    %749 = vmatpush1.msra.mxu0 0.0
    %750 = vmatprep.subr.mxu0 0.0
    %751 = vmatpush1.msra.mxu0 0.0
    %752 = vmatprep.subr.mxu0 0.0
    %753 = vmatpush1.msra.mxu0 0.0
    %754 = vmatprep.subr.mxu0 0.0
    %755 = vmatpush1.msra.mxu0 0.0
    %756 = vmatprep.subr.mxu0 0.0
    %757 = vmatpush1.msra.mxu0 0.0
    %758 = vmatprep.subr.mxu0 0.0
    %759 = vmatpush1.msra.mxu0 0.0
    %760 = vmatprep.subr.mxu0 0.0
    %761 = vmatpush1.msra.mxu0 0.0
    %762 = vmatprep.subr.mxu0 0.0
    %763 = vmatpush1.msra.mxu0 0.0
    %764 = vmatprep.subr.mxu0 0.0
    %765 = vmatpush1.msra.mxu0 0.0
    %766 = vmatprep.subr.mxu0 0.0
    %767 = vmatpush1.msra.mxu0 0.0
    %768 = vmatprep.subr.mxu0 0.0
    %769 = vmatpush1.msra.mxu0 0.0
    %770 = vmatprep.subr.mxu0 0.0
    %771 = vmatpush1.msra.mxu0 0.0
    %772 = vmatprep.subr.mxu0 0.0
    %773 = vmatpush1.msra.mxu0 0.0
    %774 = vmatprep.subr.mxu0 0.0
    %775 = vmatpush1.msra.mxu0 0.0
    %776 = vmatprep.subr.mxu0 0.0
    %777 = vmatpush1.msra.mxu0 0.0
    %778 = vmatprep.subr.mxu0 0.0
    %779 = vmatpush1.msra.mxu0 0.0
    %780 = vmatprep.subr.mxu0 0.0
    %781 = vmatpush1.msra.mxu0 0.0
    %782 = vmatprep.subr.mxu0 0.0
    %783 = vmatpush1.msra.mxu0 0.0
    %784 = vmatprep.mubr.f32.mxu0 0.0
    %785 = vmatmul.mubr.f32.gmra.mrb[0].mxu0 %v542
    %v786 = vpop.f32.mrb[0].mxu0
    %v787 = vadd.f32 %v717, %v786
    %v788 = vpop.f32.mrb[0].mxu0
    %789 = vdwg.mxu0
    %v790 = vadd.f32 %v787, %v511
    %v791 = vxor.u32 %v790, 2147483648
    %v792 = vmul.f32 %v791, 1.442695
    %v793 = vpow.pop %v792
    %v794 = vadd.f32 %v793, 1.0
    %v795 = vrcp.pop %v794
    %v796 = vmul.f32 1.0, %v795
    %v797 = vtanh.pop %v790
    %v798 = vmul.f32 %v796, %v531
    %800 = vrot.lane.b32.xlu0 %v797, 64
    %v801 = vpop.permute.xlu0 %800
    %v803 = vmul.f32 %v796, %v801
    %805 = vrot.lane.b32.xlu0 %v803, 32
    %v806 = vpop.permute.xlu0 %805
    %v808 = vadd.f32 %v798, %v806
    %v809 = vtanh.pop %v808
    %811 = vrot.lane.b32.xlu0 %v809, 64
    %v812 = vpop.permute.xlu0 %811
    %v814 = vmul.f32 %v796, %v812
    %v816 = vrot.slane %v644, 4
    %817 = vrot.lane.b32.xlu0 %v816, 32
    %v818 = vpop.permute.xlu0 %817
    %v819 = vsel %vm162, %v818, 0
    %821 = vmatprep.subr.mxu0 0.0
    %822 = vmatpush1.msra.mxu0 %v64
    %823 = vmatprep.subr.mxu0 0.0
    %824 = vmatpush1.msra.mxu0 %v65
    %825 = vmatprep.subr.mxu0 0.0
    %826 = vmatpush1.msra.mxu0 %v66
    %827 = vmatprep.subr.mxu0 0.0
    %828 = vmatpush1.msra.mxu0 %v67
    %829 = vmatprep.subr.mxu0 0.0
    %830 = vmatpush1.msra.mxu0 0.0
    %831 = vmatprep.subr.mxu0 0.0
    %832 = vmatpush1.msra.mxu0 0.0
    %833 = vmatprep.subr.mxu0 0.0
    %834 = vmatpush1.msra.mxu0 0.0
    %835 = vmatprep.subr.mxu0 0.0
    %836 = vmatpush1.msra.mxu0 0.0
    %837 = vmatprep.subr.mxu0 0.0
    %838 = vmatpush1.msra.mxu0 0.0
    %839 = vmatprep.subr.mxu0 0.0
    %840 = vmatpush1.msra.mxu0 0.0
    %841 = vmatprep.subr.mxu0 0.0
    %842 = vmatpush1.msra.mxu0 0.0
    %843 = vmatprep.subr.mxu0 0.0
    %844 = vmatpush1.msra.mxu0 0.0
    %845 = vmatprep.subr.mxu0 0.0
    %846 = vmatpush1.msra.mxu0 0.0
    %847 = vmatprep.subr.mxu0 0.0
    %848 = vmatpush1.msra.mxu0 0.0
    %849 = vmatprep.subr.mxu0 0.0
    %850 = vmatpush1.msra.mxu0 0.0
    %851 = vmatprep.subr.mxu0 0.0
    %852 = vmatpush1.msra.mxu0 0.0
    %853 = vmatprep.subr.mxu0 0.0
    %854 = vmatpush1.msra.mxu0 0.0
    %855 = vmatprep.subr.mxu0 0.0
    %856 = vmatpush1.msra.mxu0 0.0
    %857 = vmatprep.subr.mxu0 0.0
    %858 = vmatpush1.msra.mxu0 0.0
    %859 = vmatprep.subr.mxu0 0.0
    %860 = vmatpush1.msra.mxu0 0.0
    %861 = vmatprep.subr.mxu0 0.0
    %862 = vmatpush1.msra.mxu0 0.0
    %863 = vmatprep.subr.mxu0 0.0
    %864 = vmatpush1.msra.mxu0 0.0
    %865 = vmatprep.subr.mxu0 0.0
    %866 = vmatpush1.msra.mxu0 0.0
    %867 = vmatprep.subr.mxu0 0.0
    %868 = vmatpush1.msra.mxu0 0.0
    %869 = vmatprep.subr.mxu0 0.0
    %870 = vmatpush1.msra.mxu0 0.0
    %871 = vmatprep.subr.mxu0 0.0
    %872 = vmatpush1.msra.mxu0 0.0
    %873 = vmatprep.subr.mxu0 0.0
    %874 = vmatpush1.msra.mxu0 0.0
    %875 = vmatprep.subr.mxu0 0.0
    %876 = vmatpush1.msra.mxu0 0.0
    %877 = vmatprep.subr.mxu0 0.0
    %878 = vmatpush1.msra.mxu0 0.0
    %879 = vmatprep.subr.mxu0 0.0
    %880 = vmatpush1.msra.mxu0 0.0
    %881 = vmatprep.subr.mxu0 0.0
    %882 = vmatpush1.msra.mxu0 0.0
    %883 = vmatprep.subr.mxu0 0.0
    %884 = vmatpush1.msra.mxu0 0.0
    %885 = vmatprep.mubr.f32.mxu0 0.0
    %886 = vmatmul.mubr.f32.gmra.mrb[0].mxu0 %v819
    %v887 = vpop.f32.mrb[0].mxu0
    %v888 = vadd.f32 0.0, %v887
    %v889 = vpop.f32.mrb[0].mxu0
    %890 = vdwg.mxu0
    %v892 = vrot.slane %v888, 2
    %v894 = vadd.f32 %v154, %v892
    %v895 = vxor.u32 %v894, 2147483648
    %v896 = vmul.f32 %v895, 1.442695
    %v897 = vpow.pop %v896
    %v898 = vadd.f32 %v897, 1.0
    %v899 = vrcp.pop %v898
    %v900 = vmul.f32 1.0, %v899
    %v901 = vtanh.pop %v894
    %v903 = vrot.slane %v638, 6
    %v905 = vmul.f32 %v900, %v903
    %907 = vrot.lane.b32.xlu0 %v901, 64
    %v908 = vpop.permute.xlu0 %907
    %v910 = vmul.f32 %v900, %v908
    %912 = vrot.lane.b32.xlu0 %v910, 32
    %v913 = vpop.permute.xlu0 %912
    %v915 = vadd.f32 %v905, %v913
    %v916 = vtanh.pop %v915
    %918 = vrot.lane.b32.xlu0 %v916, 64
    %v919 = vpop.permute.xlu0 %918
    %v921 = vmul.f32 %v900, %v919
    %923 = vrot.lane.b32.xlu0 %v814, 32
    %v924 = vpop.permute.xlu0 %923
    %v925 = vsel %vm162, %v924, 0
    %927 = vmatprep.subr.mxu0 0.0
    %928 = vmatpush1.msra.mxu0 %v68
    %929 = vmatprep.subr.mxu0 0.0
    %930 = vmatpush1.msra.mxu0 %v69
    %931 = vmatprep.subr.mxu0 0.0
    %932 = vmatpush1.msra.mxu0 %v70
    %933 = vmatprep.subr.mxu0 0.0
    %934 = vmatpush1.msra.mxu0 %v71
    %935 = vmatprep.subr.mxu0 0.0
    %936 = vmatpush1.msra.mxu0 0.0
    %937 = vmatprep.subr.mxu0 0.0
    %938 = vmatpush1.msra.mxu0 0.0
    %939 = vmatprep.subr.mxu0 0.0
    %940 = vmatpush1.msra.mxu0 0.0
    %941 = vmatprep.subr.mxu0 0.0
    %942 = vmatpush1.msra.mxu0 0.0
    %943 = vmatprep.subr.mxu0 0.0
    %944 = vmatpush1.msra.mxu0 0.0
    %945 = vmatprep.subr.mxu0 0.0
    %946 = vmatpush1.msra.mxu0 0.0
    %947 = vmatprep.subr.mxu0 0.0
    %948 = vmatpush1.msra.mxu0 0.0
    %949 = vmatprep.subr.mxu0 0.0
    %950 = vmatpush1.msra.mxu0 0.0
    %951 = vmatprep.subr.mxu0 0.0
    %952 = vmatpush1.msra.mxu0 0.0
    %953 = vmatprep.subr.mxu0 0.0
    %954 = vmatpush1.msra.mxu0 0.0
    %955 = vmatprep.subr.mxu0 0.0
    %956 = vmatpush1.msra.mxu0 0.0
    %957 = vmatprep.subr.mxu0 0.0
    %958 = vmatpush1.msra.mxu0 0.0
    %959 = vmatprep.subr.mxu0 0.0
    %960 = vmatpush1.msra.mxu0 0.0
    %961 = vmatprep.subr.mxu0 0.0
    %962 = vmatpush1.msra.mxu0 0.0
    %963 = vmatprep.subr.mxu0 0.0
    %964 = vmatpush1.msra.mxu0 0.0
    %965 = vmatprep.subr.mxu0 0.0
    %966 = vmatpush1.msra.mxu0 0.0
    %967 = vmatprep.subr.mxu0 0.0
    %968 = vmatpush1.msra.mxu0 0.0
    %969 = vmatprep.subr.mxu0 0.0
    %970 = vmatpush1.msra.mxu0 0.0
    %971 = vmatprep.subr.mxu0 0.0
    %972 = vmatpush1.msra.mxu0 0.0
    %973 = vmatprep.subr.mxu0 0.0
    %974 = vmatpush1.msra.mxu0 0.0
    %975 = vmatprep.subr.mxu0 0.0
    %976 = vmatpush1.msra.mxu0 0.0
    %977 = vmatprep.subr.mxu0 0.0
    %978 = vmatpush1.msra.mxu0 0.0
    %979 = vmatprep.subr.mxu0 0.0
    %980 = vmatpush1.msra.mxu0 0.0
    %981 = vmatprep.subr.mxu0 0.0
    %982 = vmatpush1.msra.mxu0 0.0
    %983 = vmatprep.subr.mxu0 0.0
    %984 = vmatpush1.msra.mxu0 0.0
    %985 = vmatprep.subr.mxu0 0.0
    %986 = vmatpush1.msra.mxu0 0.0
    %987 = vmatprep.subr.mxu0 0.0
    %988 = vmatpush1.msra.mxu0 0.0
    %989 = vmatprep.subr.mxu0 0.0
    %990 = vmatpush1.msra.mxu0 0.0
    %991 = vmatprep.mubr.f32.mxu0 0.0
    %992 = vmatmul.mubr.f32.gmra.mrb[0].mxu0 %v925
    %v993 = vpop.f32.mrb[0].mxu0
    %v994 = vadd.f32 0.0, %v993
    %v995 = vpop.f32.mrb[0].mxu0
    %996 = vdwg.mxu0
    %997 = vmatprep.subr.mxu0 0.0
    %998 = vmatpush1.msra.mxu0 %v60
    %999 = vmatprep.subr.mxu0 0.0
    %1000 = vmatpush1.msra.mxu0 %v61
    %1001 = vmatprep.subr.mxu0 0.0
    %1002 = vmatpush1.msra.mxu0 %v62
    %1003 = vmatprep.subr.mxu0 0.0
    %1004 = vmatpush1.msra.mxu0 %v63
    %1005 = vmatprep.subr.mxu0 0.0
    %1006 = vmatpush1.msra.mxu0 0.0
    %1007 = vmatprep.subr.mxu0 0.0
    %1008 = vmatpush1.msra.mxu0 0.0
    %1009 = vmatprep.subr.mxu0 0.0
    %1010 = vmatpush1.msra.mxu0 0.0
    %1011 = vmatprep.subr.mxu0 0.0
    %1012 = vmatpush1.msra.mxu0 0.0
    %1013 = vmatprep.subr.mxu0 0.0
    %1014 = vmatpush1.msra.mxu0 0.0
    %1015 = vmatprep.subr.mxu0 0.0
    %1016 = vmatpush1.msra.mxu0 0.0
    %1017 = vmatprep.subr.mxu0 0.0
    %1018 = vmatpush1.msra.mxu0 0.0
    %1019 = vmatprep.subr.mxu0 0.0
    %1020 = vmatpush1.msra.mxu0 0.0
    %1021 = vmatprep.subr.mxu0 0.0
    %1022 = vmatpush1.msra.mxu0 0.0
    %1023 = vmatprep.subr.mxu0 0.0
    %1024 = vmatpush1.msra.mxu0 0.0
    %1025 = vmatprep.subr.mxu0 0.0
    %1026 = vmatpush1.msra.mxu0 0.0
    %1027 = vmatprep.subr.mxu0 0.0
    %1028 = vmatpush1.msra.mxu0 0.0
    %1029 = vmatprep.subr.mxu0 0.0
    %1030 = vmatpush1.msra.mxu0 0.0
    %1031 = vmatprep.subr.mxu0 0.0
    %1032 = vmatpush1.msra.mxu0 0.0
    %1033 = vmatprep.subr.mxu0 0.0
    %1034 = vmatpush1.msra.mxu0 0.0
    %1035 = vmatprep.subr.mxu0 0.0
    %1036 = vmatpush1.msra.mxu0 0.0
    %1037 = vmatprep.subr.mxu0 0.0
    %1038 = vmatpush1.msra.mxu0 0.0
    %1039 = vmatprep.subr.mxu0 0.0
    %1040 = vmatpush1.msra.mxu0 0.0
    %1041 = vmatprep.subr.mxu0 0.0
    %1042 = vmatpush1.msra.mxu0 0.0
    %1043 = vmatprep.subr.mxu0 0.0
    %1044 = vmatpush1.msra.mxu0 0.0
    %1045 = vmatprep.subr.mxu0 0.0
    %1046 = vmatpush1.msra.mxu0 0.0
    %1047 = vmatprep.subr.mxu0 0.0
    %1048 = vmatpush1.msra.mxu0 0.0
    %1049 = vmatprep.subr.mxu0 0.0
    %1050 = vmatpush1.msra.mxu0 0.0
    %1051 = vmatprep.subr.mxu0 0.0
    %1052 = vmatpush1.msra.mxu0 0.0
    %1053 = vmatprep.subr.mxu0 0.0
    %1054 = vmatpush1.msra.mxu0 0.0
    %1055 = vmatprep.subr.mxu0 0.0
    %1056 = vmatpush1.msra.mxu0 0.0
    %1057 = vmatprep.subr.mxu0 0.0
    %1058 = vmatpush1.msra.mxu0 0.0
    %1059 = vmatprep.subr.mxu0 0.0
    %1060 = vmatpush1.msra.mxu0 0.0
    %1061 = vmatprep.mubr.f32.mxu0 0.0
    %1062 = vmatmul.mubr.f32.gmra.mrb[0].mxu0 %v819
    %v1063 = vpop.f32.mrb[0].mxu0
    %v1064 = vadd.f32 %v994, %v1063
    %v1065 = vpop.f32.mrb[0].mxu0
    %1066 = vdwg.mxu0
    %v1067 = vadd.f32 %v1064, %v511
    %v1068 = vxor.u32 %v1067, 2147483648
    %v1069 = vmul.f32 %v1068, 1.442695
    %v1070 = vpow.pop %v1069
    %v1071 = vadd.f32 %v1070, 1.0
    %v1072 = vrcp.pop %v1071
    %v1073 = vmul.f32 1.0, %v1072
    %v1074 = vtanh.pop %v1067
    %v1075 = vmul.f32 %v1073, %v808
    %1077 = vrot.lane.b32.xlu0 %v1074, 64
    %v1078 = vpop.permute.xlu0 %1077
    %v1080 = vmul.f32 %v1073, %v1078
    %1082 = vrot.lane.b32.xlu0 %v1080, 32
    %v1083 = vpop.permute.xlu0 %1082
    %v1085 = vadd.f32 %v1075, %v1083
    %v1086 = vtanh.pop %v1085
    %1088 = vrot.lane.b32.xlu0 %v1086, 64
    %v1089 = vpop.permute.xlu0 %1088
    %v1091 = vmul.f32 %v1073, %v1089
    %v1093 = vrot.slane %v921, 6
    %1094 = vrot.lane.b32.xlu0 %v1093, 32
    %v1095 = vpop.permute.xlu0 %1094
    %v1096 = vsel %vm162, %v1095, 0
    %1098 = vmatprep.subr.mxu0 0.0
    %1099 = vmatpush1.msra.mxu0 %v64
    %1100 = vmatprep.subr.mxu0 0.0
    %1101 = vmatpush1.msra.mxu0 %v65
    %1102 = vmatprep.subr.mxu0 0.0
    %1103 = vmatpush1.msra.mxu0 %v66
    %1104 = vmatprep.subr.mxu0 0.0
    %1105 = vmatpush1.msra.mxu0 %v67
    %1106 = vmatprep.subr.mxu0 0.0
    %1107 = vmatpush1.msra.mxu0 0.0
    %1108 = vmatprep.subr.mxu0 0.0
    %1109 = vmatpush1.msra.mxu0 0.0
    %1110 = vmatprep.subr.mxu0 0.0
    %1111 = vmatpush1.msra.mxu0 0.0
    %1112 = vmatprep.subr.mxu0 0.0
    %1113 = vmatpush1.msra.mxu0 0.0
    %1114 = vmatprep.subr.mxu0 0.0
    %1115 = vmatpush1.msra.mxu0 0.0
    %1116 = vmatprep.subr.mxu0 0.0
    %1117 = vmatpush1.msra.mxu0 0.0
    %1118 = vmatprep.subr.mxu0 0.0
    %1119 = vmatpush1.msra.mxu0 0.0
    %1120 = vmatprep.subr.mxu0 0.0
    %1121 = vmatpush1.msra.mxu0 0.0
    %1122 = vmatprep.subr.mxu0 0.0
    %1123 = vmatpush1.msra.mxu0 0.0
    %1124 = vmatprep.subr.mxu0 0.0
    %1125 = vmatpush1.msra.mxu0 0.0
    %1126 = vmatprep.subr.mxu0 0.0
    %1127 = vmatpush1.msra.mxu0 0.0
    %1128 = vmatprep.subr.mxu0 0.0
    %1129 = vmatpush1.msra.mxu0 0.0
    %1130 = vmatprep.subr.mxu0 0.0
    %1131 = vmatpush1.msra.mxu0 0.0
    %1132 = vmatprep.subr.mxu0 0.0
    %1133 = vmatpush1.msra.mxu0 0.0
    %1134 = vmatprep.subr.mxu0 0.0
    %1135 = vmatpush1.msra.mxu0 0.0
    %1136 = vmatprep.subr.mxu0 0.0
    %1137 = vmatpush1.msra.mxu0 0.0
    %1138 = vmatprep.subr.mxu0 0.0
    %1139 = vmatpush1.msra.mxu0 0.0
    %1140 = vmatprep.subr.mxu0 0.0
    %1141 = vmatpush1.msra.mxu0 0.0
    %1142 = vmatprep.subr.mxu0 0.0
    %1143 = vmatpush1.msra.mxu0 0.0
    %1144 = vmatprep.subr.mxu0 0.0
    %1145 = vmatpush1.msra.mxu0 0.0
    %1146 = vmatprep.subr.mxu0 0.0
    %1147 = vmatpush1.msra.mxu0 0.0
    %1148 = vmatprep.subr.mxu0 0.0
    %1149 = vmatpush1.msra.mxu0 0.0
    %1150 = vmatprep.subr.mxu0 0.0
    %1151 = vmatpush1.msra.mxu0 0.0
    %1152 = vmatprep.subr.mxu0 0.0
    %1153 = vmatpush1.msra.mxu0 0.0
    %1154 = vmatprep.subr.mxu0 0.0
    %1155 = vmatpush1.msra.mxu0 0.0
    %1156 = vmatprep.subr.mxu0 0.0
    %1157 = vmatpush1.msra.mxu0 0.0
    %1158 = vmatprep.subr.mxu0 0.0
    %1159 = vmatpush1.msra.mxu0 0.0
    %1160 = vmatprep.subr.mxu0 0.0
    %1161 = vmatpush1.msra.mxu0 0.0
    %1162 = vmatprep.mubr.f32.mxu0 0.0
    %1163 = vmatmul.mubr.f32.gmra.mrb[0].mxu0 %v1096
    %v1164 = vpop.f32.mrb[0].mxu0
    %v1165 = vadd.f32 0.0, %v1164
    %v1166 = vpop.f32.mrb[0].mxu0
    %1167 = vdwg.mxu0
    %v1168 = vadd.f32 %v159, %v1165
    %v1169 = vxor.u32 %v1168, 2147483648
    %v1170 = vmul.f32 %v1169, 1.442695
    %v1171 = vpow.pop %v1170
    %v1172 = vadd.f32 %v1171, 1.0
    %v1173 = vrcp.pop %v1172
    %v1174 = vmul.f32 1.0, %v1173
    %v1175 = vtanh.pop %v1168
    %v1177 = vrot.slane %v915, 6
    %v1179 = vmul.f32 %v1174, %v1177
    %1181 = vrot.lane.b32.xlu0 %v1175, 64
    %v1182 = vpop.permute.xlu0 %1181
    %v1184 = vmul.f32 %v1174, %v1182
    %1186 = vrot.lane.b32.xlu0 %v1184, 32
    %v1187 = vpop.permute.xlu0 %1186
    %v1189 = vadd.f32 %v1179, %v1187
    %v1190 = vtanh.pop %v1189
    %1192 = vrot.lane.b32.xlu0 %v1190, 64
    %v1193 = vpop.permute.xlu0 %1192
    %v1195 = vmul.f32 %v1174, %v1193
    %1197 = vrot.lane.b32.xlu0 %v1091, 32
    %v1198 = vpop.permute.xlu0 %1197
    %v1199 = vsel %vm162, %v1198, 0
    %1201 = vmatprep.subr.mxu0 0.0
    %1202 = vmatpush1.msra.mxu0 %v68
    %1203 = vmatprep.subr.mxu0 0.0
    %1204 = vmatpush1.msra.mxu0 %v69
    %1205 = vmatprep.subr.mxu0 0.0
    %1206 = vmatpush1.msra.mxu0 %v70
    %1207 = vmatprep.subr.mxu0 0.0
    %1208 = vmatpush1.msra.mxu0 %v71
    %1209 = vmatprep.subr.mxu0 0.0
    %1210 = vmatpush1.msra.mxu0 0.0
    %1211 = vmatprep.subr.mxu0 0.0
    %1212 = vmatpush1.msra.mxu0 0.0
    %1213 = vmatprep.subr.mxu0 0.0
    %1214 = vmatpush1.msra.mxu0 0.0
    %1215 = vmatprep.subr.mxu0 0.0
    %1216 = vmatpush1.msra.mxu0 0.0
    %1217 = vmatprep.subr.mxu0 0.0
    %1218 = vmatpush1.msra.mxu0 0.0
    %1219 = vmatprep.subr.mxu0 0.0
    %1220 = vmatpush1.msra.mxu0 0.0
    %1221 = vmatprep.subr.mxu0 0.0
    %1222 = vmatpush1.msra.mxu0 0.0
    %1223 = vmatprep.subr.mxu0 0.0
    %1224 = vmatpush1.msra.mxu0 0.0
    %1225 = vmatprep.subr.mxu0 0.0
    %1226 = vmatpush1.msra.mxu0 0.0
    %1227 = vmatprep.subr.mxu0 0.0
    %1228 = vmatpush1.msra.mxu0 0.0
    %1229 = vmatprep.subr.mxu0 0.0
    %1230 = vmatpush1.msra.mxu0 0.0
    %1231 = vmatprep.subr.mxu0 0.0
    %1232 = vmatpush1.msra.mxu0 0.0
    %1233 = vmatprep.subr.mxu0 0.0
    %1234 = vmatpush1.msra.mxu0 0.0
    %1235 = vmatprep.subr.mxu0 0.0
    %1236 = vmatpush1.msra.mxu0 0.0
    %1237 = vmatprep.subr.mxu0 0.0
    %1238 = vmatpush1.msra.mxu0 0.0
    %1239 = vmatprep.subr.mxu0 0.0
    %1240 = vmatpush1.msra.mxu0 0.0
    %1241 = vmatprep.subr.mxu0 0.0
    %1242 = vmatpush1.msra.mxu0 0.0
    %1243 = vmatprep.subr.mxu0 0.0
    %1244 = vmatpush1.msra.mxu0 0.0
    %1245 = vmatprep.subr.mxu0 0.0
    %1246 = vmatpush1.msra.mxu0 0.0
    %1247 = vmatprep.subr.mxu0 0.0
    %1248 = vmatpush1.msra.mxu0 0.0
    %1249 = vmatprep.subr.mxu0 0.0
    %1250 = vmatpush1.msra.mxu0 0.0
    %1251 = vmatprep.subr.mxu0 0.0
    %1252 = vmatpush1.msra.mxu0 0.0
    %1253 = vmatprep.subr.mxu0 0.0
    %1254 = vmatpush1.msra.mxu0 0.0
    %1255 = vmatprep.subr.mxu0 0.0
    %1256 = vmatpush1.msra.mxu0 0.0
    %1257 = vmatprep.subr.mxu0 0.0
    %1258 = vmatpush1.msra.mxu0 0.0
    %1259 = vmatprep.subr.mxu0 0.0
    %1260 = vmatpush1.msra.mxu0 0.0
    %1261 = vmatprep.subr.mxu0 0.0
    %1262 = vmatpush1.msra.mxu0 0.0
    %1263 = vmatprep.subr.mxu0 0.0
    %1264 = vmatpush1.msra.mxu0 0.0
    %1265 = vmatprep.mubr.f32.mxu0 0.0
    %1266 = vmatmul.mubr.f32.gmra.mrb[0].mxu0 %v1199
    %v1267 = vpop.f32.mrb[0].mxu0
    %v1268 = vadd.f32 0.0, %v1267
    %v1269 = vpop.f32.mrb[0].mxu0
    %1270 = vdwg.mxu0
    %1271 = vmatprep.subr.mxu0 0.0
    %1272 = vmatpush1.msra.mxu0 %v60
    %1273 = vmatprep.subr.mxu0 0.0
    %1274 = vmatpush1.msra.mxu0 %v61
    %1275 = vmatprep.subr.mxu0 0.0
    %1276 = vmatpush1.msra.mxu0 %v62
    %1277 = vmatprep.subr.mxu0 0.0
    %1278 = vmatpush1.msra.mxu0 %v63
    %1279 = vmatprep.subr.mxu0 0.0
    %1280 = vmatpush1.msra.mxu0 0.0
    %1281 = vmatprep.subr.mxu0 0.0
    %1282 = vmatpush1.msra.mxu0 0.0
    %1283 = vmatprep.subr.mxu0 0.0
    %1284 = vmatpush1.msra.mxu0 0.0
    %1285 = vmatprep.subr.mxu0 0.0
    %1286 = vmatpush1.msra.mxu0 0.0
    %1287 = vmatprep.subr.mxu0 0.0
    %1288 = vmatpush1.msra.mxu0 0.0
    %1289 = vmatprep.subr.mxu0 0.0
    %1290 = vmatpush1.msra.mxu0 0.0
    %1291 = vmatprep.subr.mxu0 0.0
    %1292 = vmatpush1.msra.mxu0 0.0
    %1293 = vmatprep.subr.mxu0 0.0
    %1294 = vmatpush1.msra.mxu0 0.0
    %1295 = vmatprep.subr.mxu0 0.0
    %1296 = vmatpush1.msra.mxu0 0.0
    %1297 = vmatprep.subr.mxu0 0.0
    %1298 = vmatpush1.msra.mxu0 0.0
    %1299 = vmatprep.subr.mxu0 0.0
    %1300 = vmatpush1.msra.mxu0 0.0
    %1301 = vmatprep.subr.mxu0 0.0
    %1302 = vmatpush1.msra.mxu0 0.0
    %1303 = vmatprep.subr.mxu0 0.0
    %1304 = vmatpush1.msra.mxu0 0.0
    %1305 = vmatprep.subr.mxu0 0.0
    %1306 = vmatpush1.msra.mxu0 0.0
    %1307 = vmatprep.subr.mxu0 0.0
    %1308 = vmatpush1.msra.mxu0 0.0
    %1309 = vmatprep.subr.mxu0 0.0
    %1310 = vmatpush1.msra.mxu0 0.0
    %1311 = vmatprep.subr.mxu0 0.0
    %1312 = vmatpush1.msra.mxu0 0.0
    %1313 = vmatprep.subr.mxu0 0.0
    %1314 = vmatpush1.msra.mxu0 0.0
    %1315 = vmatprep.subr.mxu0 0.0
    %1316 = vmatpush1.msra.mxu0 0.0
    %1317 = vmatprep.subr.mxu0 0.0
    %1318 = vmatpush1.msra.mxu0 0.0
    %1319 = vmatprep.subr.mxu0 0.0
    %1320 = vmatpush1.msra.mxu0 0.0
    %1321 = vmatprep.subr.mxu0 0.0
    %1322 = vmatpush1.msra.mxu0 0.0
    %1323 = vmatprep.subr.mxu0 0.0
    %1324 = vmatpush1.msra.mxu0 0.0
    %1325 = vmatprep.subr.mxu0 0.0
    %1326 = vmatpush1.msra.mxu0 0.0
    %1327 = vmatprep.subr.mxu0 0.0
    %1328 = vmatpush1.msra.mxu0 0.0
    %1329 = vmatprep.subr.mxu0 0.0
    %1330 = vmatpush1.msra.mxu0 0.0
    %1331 = vmatprep.subr.mxu0 0.0
    %1332 = vmatpush1.msra.mxu0 0.0
    %1333 = vmatprep.subr.mxu0 0.0
    %1334 = vmatpush1.msra.mxu0 0.0
    %1335 = vmatprep.mubr.f32.mxu0 0.0
    %1336 = vmatmul.mubr.f32.gmra.mrb[0].mxu0 %v1096
    %v1337 = vpop.f32.mrb[0].mxu0
    %v1338 = vadd.f32 %v1268, %v1337
    %v1339 = vpop.f32.mrb[0].mxu0
    %1340 = vdwg.mxu0
    %v1341 = vadd.f32 %v1338, %v511
    %v1342 = vxor.u32 %v1341, 2147483648
    %v1343 = vmul.f32 %v1342, 1.442695
    %v1344 = vpow.pop %v1343
    %v1345 = vadd.f32 %v1344, 1.0
    %v1346 = vrcp.pop %v1345
    %v1347 = vmul.f32 1.0, %v1346
    %v1348 = vtanh.pop %v1341
    %v1349 = vmul.f32 %v1347, %v1085
    %1351 = vrot.lane.b32.xlu0 %v1348, 64
    %v1352 = vpop.permute.xlu0 %1351
    %v1354 = vmul.f32 %v1347, %v1352
    %1356 = vrot.lane.b32.xlu0 %v1354, 32
    %v1357 = vpop.permute.xlu0 %1356
    %v1359 = vadd.f32 %v1349, %v1357
    %v1360 = vtanh.pop %v1359
    %1362 = vrot.lane.b32.xlu0 %v1360, 64
    %v1363 = vpop.permute.xlu0 %1362
    %v1365 = vmul.f32 %v1347, %v1363
    %1367 = vrot.lane.b32.xlu0 %v1195, 32
    %v1368 = vpop.permute.xlu0 %1367
    %v1369 = vsel %vm162, %v1368, 0
    %1371 = vmatprep.subr.mxu0 0.0
    %1372 = vmatpush1.msra.mxu0 %v64
    %1373 = vmatprep.subr.mxu0 0.0
    %1374 = vmatpush1.msra.mxu0 %v65
    %1375 = vmatprep.subr.mxu0 0.0
    %1376 = vmatpush1.msra.mxu0 %v66
    %1377 = vmatprep.subr.mxu0 0.0
    %1378 = vmatpush1.msra.mxu0 %v67
    %1379 = vmatprep.subr.mxu0 0.0
    %1380 = vmatpush1.msra.mxu0 0.0
    %1381 = vmatprep.subr.mxu0 0.0
    %1382 = vmatpush1.msra.mxu0 0.0
    %1383 = vmatprep.subr.mxu0 0.0
    %1384 = vmatpush1.msra.mxu0 0.0
    %1385 = vmatprep.subr.mxu0 0.0
    %1386 = vmatpush1.msra.mxu0 0.0
    %1387 = vmatprep.subr.mxu0 0.0
    %1388 = vmatpush1.msra.mxu0 0.0
    %1389 = vmatprep.subr.mxu0 0.0
    %1390 = vmatpush1.msra.mxu0 0.0
    %1391 = vmatprep.subr.mxu0 0.0
    %1392 = vmatpush1.msra.mxu0 0.0
    %1393 = vmatprep.subr.mxu0 0.0
    %1394 = vmatpush1.msra.mxu0 0.0
    %1395 = vmatprep.subr.mxu0 0.0
    %1396 = vmatpush1.msra.mxu0 0.0
    %1397 = vmatprep.subr.mxu0 0.0
    %1398 = vmatpush1.msra.mxu0 0.0
    %1399 = vmatprep.subr.mxu0 0.0
    %1400 = vmatpush1.msra.mxu0 0.0
    %1401 = vmatprep.subr.mxu0 0.0
    %1402 = vmatpush1.msra.mxu0 0.0
    %1403 = vmatprep.subr.mxu0 0.0
    %1404 = vmatpush1.msra.mxu0 0.0
    %1405 = vmatprep.subr.mxu0 0.0
    %1406 = vmatpush1.msra.mxu0 0.0
    %1407 = vmatprep.subr.mxu0 0.0
    %1408 = vmatpush1.msra.mxu0 0.0
    %1409 = vmatprep.subr.mxu0 0.0
    %1410 = vmatpush1.msra.mxu0 0.0
    %1411 = vmatprep.subr.mxu0 0.0
    %1412 = vmatpush1.msra.mxu0 0.0
    %1413 = vmatprep.subr.mxu0 0.0
    %1414 = vmatpush1.msra.mxu0 0.0
    %1415 = vmatprep.subr.mxu0 0.0
    %1416 = vmatpush1.msra.mxu0 0.0
    %1417 = vmatprep.subr.mxu0 0.0
    %1418 = vmatpush1.msra.mxu0 0.0
    %1419 = vmatprep.subr.mxu0 0.0
    %1420 = vmatpush1.msra.mxu0 0.0
    %1421 = vmatprep.subr.mxu0 0.0
    %1422 = vmatpush1.msra.mxu0 0.0
    %1423 = vmatprep.subr.mxu0 0.0
    %1424 = vmatpush1.msra.mxu0 0.0
    %1425 = vmatprep.subr.mxu0 0.0
    %1426 = vmatpush1.msra.mxu0 0.0
    %1427 = vmatprep.subr.mxu0 0.0
    %1428 = vmatpush1.msra.mxu0 0.0
    %1429 = vmatprep.subr.mxu0 0.0
    %1430 = vmatpush1.msra.mxu0 0.0
    %1431 = vmatprep.subr.mxu0 0.0
    %1432 = vmatpush1.msra.mxu0 0.0
    %1433 = vmatprep.subr.mxu0 0.0
    %1434 = vmatpush1.msra.mxu0 0.0
    %1435 = vmatprep.mubr.f32.mxu0 0.0
    %1436 = vmatmul.mubr.f32.gmra.mrb[0].mxu0 %v1369
    %v1437 = vpop.f32.mrb[0].mxu0
    %v1438 = vadd.f32 0.0, %v1437
    %v1439 = vpop.f32.mrb[0].mxu0
    %1440 = vdwg.mxu0
    %v1442 = vrot.slane %v1438, 6
    %v1444 = vadd.f32 %v159, %v1442
    %v1445 = vxor.u32 %v1444, 2147483648
    %v1446 = vmul.f32 %v1445, 1.442695
    %v1447 = vpow.pop %v1446
    %v1448 = vadd.f32 %v1447, 1.0
    %v1449 = vrcp.pop %v1448
    %v1450 = vmul.f32 1.0, %v1449
    %v1451 = vtanh.pop %v1444
    %v1453 = vrot.slane %v1189, 6
    %v1455 = vmul.f32 %v1450, %v1453
    %1457 = vrot.lane.b32.xlu0 %v1451, 64
    %v1458 = vpop.permute.xlu0 %1457
    %v1460 = vmul.f32 %v1450, %v1458
    %1462 = vrot.lane.b32.xlu0 %v1460, 32
    %v1463 = vpop.permute.xlu0 %1462
    %v1465 = vadd.f32 %v1455, %v1463
    %v1466 = vtanh.pop %v1465
    %1468 = vrot.lane.b32.xlu0 %v1466, 64
    %v1469 = vpop.permute.xlu0 %1468
    %v1471 = vmul.f32 %v1450, %v1469
    %1473 = vrot.lane.b32.xlu0 %v1365, 32
    %v1474 = vpop.permute.xlu0 %1473
    %v1475 = vsel %vm162, %v1474, 0
    %1477 = vmatprep.subr.mxu0 0.0
    %1478 = vmatpush1.msra.mxu0 %v68
    %1479 = vmatprep.subr.mxu0 0.0
    %1480 = vmatpush1.msra.mxu0 %v69
    %1481 = vmatprep.subr.mxu0 0.0
    %1482 = vmatpush1.msra.mxu0 %v70
    %1483 = vmatprep.subr.mxu0 0.0
    %1484 = vmatpush1.msra.mxu0 %v71
    %1485 = vmatprep.subr.mxu0 0.0
    %1486 = vmatpush1.msra.mxu0 0.0
    %1487 = vmatprep.subr.mxu0 0.0
    %1488 = vmatpush1.msra.mxu0 0.0
    %1489 = vmatprep.subr.mxu0 0.0
    %1490 = vmatpush1.msra.mxu0 0.0
    %1491 = vmatprep.subr.mxu0 0.0
    %1492 = vmatpush1.msra.mxu0 0.0
    %1493 = vmatprep.subr.mxu0 0.0
    %1494 = vmatpush1.msra.mxu0 0.0
    %1495 = vmatprep.subr.mxu0 0.0
    %1496 = vmatpush1.msra.mxu0 0.0
    %1497 = vmatprep.subr.mxu0 0.0
    %1498 = vmatpush1.msra.mxu0 0.0
    %1499 = vmatprep.subr.mxu0 0.0
    %1500 = vmatpush1.msra.mxu0 0.0
    %1501 = vmatprep.subr.mxu0 0.0
    %1502 = vmatpush1.msra.mxu0 0.0
    %1503 = vmatprep.subr.mxu0 0.0
    %1504 = vmatpush1.msra.mxu0 0.0
    %1505 = vmatprep.subr.mxu0 0.0
    %1506 = vmatpush1.msra.mxu0 0.0
    %1507 = vmatprep.subr.mxu0 0.0
    %1508 = vmatpush1.msra.mxu0 0.0
    %1509 = vmatprep.subr.mxu0 0.0
    %1510 = vmatpush1.msra.mxu0 0.0
    %1511 = vmatprep.subr.mxu0 0.0
    %1512 = vmatpush1.msra.mxu0 0.0
    %1513 = vmatprep.subr.mxu0 0.0
    %1514 = vmatpush1.msra.mxu0 0.0
    %1515 = vmatprep.subr.mxu0 0.0
    %1516 = vmatpush1.msra.mxu0 0.0
    %1517 = vmatprep.subr.mxu0 0.0
    %1518 = vmatpush1.msra.mxu0 0.0
    %1519 = vmatprep.subr.mxu0 0.0
    %1520 = vmatpush1.msra.mxu0 0.0
    %1521 = vmatprep.subr.mxu0 0.0
    %1522 = vmatpush1.msra.mxu0 0.0
    %1523 = vmatprep.subr.mxu0 0.0
    %1524 = vmatpush1.msra.mxu0 0.0
    %1525 = vmatprep.subr.mxu0 0.0
    %1526 = vmatpush1.msra.mxu0 0.0
    %1527 = vmatprep.subr.mxu0 0.0
    %1528 = vmatpush1.msra.mxu0 0.0
    %1529 = vmatprep.subr.mxu0 0.0
    %1530 = vmatpush1.msra.mxu0 0.0
    %1531 = vmatprep.subr.mxu0 0.0
    %1532 = vmatpush1.msra.mxu0 0.0
    %1533 = vmatprep.subr.mxu0 0.0
    %1534 = vmatpush1.msra.mxu0 0.0
    %1535 = vmatprep.subr.mxu0 0.0
    %1536 = vmatpush1.msra.mxu0 0.0
    %1537 = vmatprep.subr.mxu0 0.0
    %1538 = vmatpush1.msra.mxu0 0.0
    %1539 = vmatprep.subr.mxu0 0.0
    %1540 = vmatpush1.msra.mxu0 0.0
    %1541 = vmatprep.mubr.f32.mxu0 0.0
    %1542 = vmatmul.mubr.f32.gmra.mrb[0].mxu0 %v1475
    %v1543 = vpop.f32.mrb[0].mxu0
    %v1544 = vadd.f32 0.0, %v1543
    %v1545 = vpop.f32.mrb[0].mxu0
    %1546 = vdwg.mxu0
    %1547 = vmatprep.subr.mxu0 0.0
    %1548 = vmatpush1.msra.mxu0 %v60
    %1549 = vmatprep.subr.mxu0 0.0
    %1550 = vmatpush1.msra.mxu0 %v61
    %1551 = vmatprep.subr.mxu0 0.0
    %1552 = vmatpush1.msra.mxu0 %v62
    %1553 = vmatprep.subr.mxu0 0.0
    %1554 = vmatpush1.msra.mxu0 %v63
    %1555 = vmatprep.subr.mxu0 0.0
    %1556 = vmatpush1.msra.mxu0 0.0
    %1557 = vmatprep.subr.mxu0 0.0
    %1558 = vmatpush1.msra.mxu0 0.0
    %1559 = vmatprep.subr.mxu0 0.0
    %1560 = vmatpush1.msra.mxu0 0.0
    %1561 = vmatprep.subr.mxu0 0.0
    %1562 = vmatpush1.msra.mxu0 0.0
    %1563 = vmatprep.subr.mxu0 0.0
    %1564 = vmatpush1.msra.mxu0 0.0
    %1565 = vmatprep.subr.mxu0 0.0
    %1566 = vmatpush1.msra.mxu0 0.0
    %1567 = vmatprep.subr.mxu0 0.0
    %1568 = vmatpush1.msra.mxu0 0.0
    %1569 = vmatprep.subr.mxu0 0.0
    %1570 = vmatpush1.msra.mxu0 0.0
    %1571 = vmatprep.subr.mxu0 0.0
    %1572 = vmatpush1.msra.mxu0 0.0
    %1573 = vmatprep.subr.mxu0 0.0
    %1574 = vmatpush1.msra.mxu0 0.0
    %1575 = vmatprep.subr.mxu0 0.0
    %1576 = vmatpush1.msra.mxu0 0.0
    %1577 = vmatprep.subr.mxu0 0.0
    %1578 = vmatpush1.msra.mxu0 0.0
    %1579 = vmatprep.subr.mxu0 0.0
    %1580 = vmatpush1.msra.mxu0 0.0
    %1581 = vmatprep.subr.mxu0 0.0
    %1582 = vmatpush1.msra.mxu0 0.0
    %1583 = vmatprep.subr.mxu0 0.0
    %1584 = vmatpush1.msra.mxu0 0.0
    %1585 = vmatprep.subr.mxu0 0.0
    %1586 = vmatpush1.msra.mxu0 0.0
    %1587 = vmatprep.subr.mxu0 0.0
    %1588 = vmatpush1.msra.mxu0 0.0
    %1589 = vmatprep.subr.mxu0 0.0
    %1590 = vmatpush1.msra.mxu0 0.0
    %1591 = vmatprep.subr.mxu0 0.0
    %1592 = vmatpush1.msra.mxu0 0.0
    %1593 = vmatprep.subr.mxu0 0.0
    %1594 = vmatpush1.msra.mxu0 0.0
    %1595 = vmatprep.subr.mxu0 0.0
    %1596 = vmatpush1.msra.mxu0 0.0
    %1597 = vmatprep.subr.mxu0 0.0
    %1598 = vmatpush1.msra.mxu0 0.0
    %1599 = vmatprep.subr.mxu0 0.0
    %1600 = vmatpush1.msra.mxu0 0.0
    %1601 = vmatprep.subr.mxu0 0.0
    %1602 = vmatpush1.msra.mxu0 0.0
    %1603 = vmatprep.subr.mxu0 0.0
    %1604 = vmatpush1.msra.mxu0 0.0
    %1605 = vmatprep.subr.mxu0 0.0
    %1606 = vmatpush1.msra.mxu0 0.0
    %1607 = vmatprep.subr.mxu0 0.0
    %1608 = vmatpush1.msra.mxu0 0.0
    %1609 = vmatprep.subr.mxu0 0.0
    %1610 = vmatpush1.msra.mxu0 0.0
    %1611 = vmatprep.mubr.f32.mxu0 0.0
    %1612 = vmatmul.mubr.f32.gmra.mrb[0].mxu0 %v1369
    %v1613 = vpop.f32.mrb[0].mxu0
    %v1614 = vadd.f32 %v1544, %v1613
    %v1615 = vpop.f32.mrb[0].mxu0
    %1616 = vdwg.mxu0
    %v1617 = vadd.f32 %v1614, %v511
    %v1618 = vxor.u32 %v1617, 2147483648
    %v1619 = vmul.f32 %v1618, 1.442695
    %v1620 = vpow.pop %v1619
    %v1621 = vadd.f32 %v1620, 1.0
    %v1622 = vrcp.pop %v1621
    %v1623 = vmul.f32 1.0, %v1622
    %v1624 = vtanh.pop %v1617
    %v1625 = vmul.f32 %v1623, %v1359
    %1627 = vrot.lane.b32.xlu0 %v1624, 64
    %v1628 = vpop.permute.xlu0 %1627
    %v1630 = vmul.f32 %v1623, %v1628
    %1632 = vrot.lane.b32.xlu0 %v1630, 32
    %v1633 = vpop.permute.xlu0 %1632
    %v1635 = vadd.f32 %v1625, %v1633
    %v1636 = vtanh.pop %v1635
    %1638 = vrot.lane.b32.xlu0 %v1636, 64
    %v1639 = vpop.permute.xlu0 %1638
    %v1641 = vmul.f32 %v1623, %v1639
    %v1643 = vrot.slane %v1471, 2
    %1644 = vrot.lane.b32.xlu0 %v1643, 32
    %v1645 = vpop.permute.xlu0 %1644
    %v1646 = vsel %vm162, %v1645, 0
    %1648 = vmatprep.subr.mxu0 0.0
    %1649 = vmatpush1.msra.mxu0 %v64
    %1650 = vmatprep.subr.mxu0 0.0
    %1651 = vmatpush1.msra.mxu0 %v65
    %1652 = vmatprep.subr.mxu0 0.0
    %1653 = vmatpush1.msra.mxu0 %v66
    %1654 = vmatprep.subr.mxu0 0.0
    %1655 = vmatpush1.msra.mxu0 %v67
    %1656 = vmatprep.subr.mxu0 0.0
    %1657 = vmatpush1.msra.mxu0 0.0
    %1658 = vmatprep.subr.mxu0 0.0
    %1659 = vmatpush1.msra.mxu0 0.0
    %1660 = vmatprep.subr.mxu0 0.0
    %1661 = vmatpush1.msra.mxu0 0.0
    %1662 = vmatprep.subr.mxu0 0.0
    %1663 = vmatpush1.msra.mxu0 0.0
    %1664 = vmatprep.subr.mxu0 0.0
    %1665 = vmatpush1.msra.mxu0 0.0
    %1666 = vmatprep.subr.mxu0 0.0
    %1667 = vmatpush1.msra.mxu0 0.0
    %1668 = vmatprep.subr.mxu0 0.0
    %1669 = vmatpush1.msra.mxu0 0.0
    %1670 = vmatprep.subr.mxu0 0.0
    %1671 = vmatpush1.msra.mxu0 0.0
    %1672 = vmatprep.subr.mxu0 0.0
    %1673 = vmatpush1.msra.mxu0 0.0
    %1674 = vmatprep.subr.mxu0 0.0
    %1675 = vmatpush1.msra.mxu0 0.0
    %1676 = vmatprep.subr.mxu0 0.0
    %1677 = vmatpush1.msra.mxu0 0.0
    %1678 = vmatprep.subr.mxu0 0.0
    %1679 = vmatpush1.msra.mxu0 0.0
    %1680 = vmatprep.subr.mxu0 0.0
    %1681 = vmatpush1.msra.mxu0 0.0
    %1682 = vmatprep.subr.mxu0 0.0
    %1683 = vmatpush1.msra.mxu0 0.0
    %1684 = vmatprep.subr.mxu0 0.0
    %1685 = vmatpush1.msra.mxu0 0.0
    %1686 = vmatprep.subr.mxu0 0.0
    %1687 = vmatpush1.msra.mxu0 0.0
    %1688 = vmatprep.subr.mxu0 0.0
    %1689 = vmatpush1.msra.mxu0 0.0
    %1690 = vmatprep.subr.mxu0 0.0
    %1691 = vmatpush1.msra.mxu0 0.0
    %1692 = vmatprep.subr.mxu0 0.0
    %1693 = vmatpush1.msra.mxu0 0.0
    %1694 = vmatprep.subr.mxu0 0.0
    %1695 = vmatpush1.msra.mxu0 0.0
    %1696 = vmatprep.subr.mxu0 0.0
    %1697 = vmatpush1.msra.mxu0 0.0
    %1698 = vmatprep.subr.mxu0 0.0
    %1699 = vmatpush1.msra.mxu0 0.0
    %1700 = vmatprep.subr.mxu0 0.0
    %1701 = vmatpush1.msra.mxu0 0.0
    %1702 = vmatprep.subr.mxu0 0.0
    %1703 = vmatpush1.msra.mxu0 0.0
    %1704 = vmatprep.subr.mxu0 0.0
    %1705 = vmatpush1.msra.mxu0 0.0
    %1706 = vmatprep.subr.mxu0 0.0
    %1707 = vmatpush1.msra.mxu0 0.0
    %1708 = vmatprep.subr.mxu0 0.0
    %1709 = vmatpush1.msra.mxu0 0.0
    %1710 = vmatprep.subr.mxu0 0.0
    %1711 = vmatpush1.msra.mxu0 0.0
    %1712 = vmatprep.mubr.f32.mxu0 0.0
    %1713 = vmatmul.mubr.f32.gmra.mrb[0].mxu0 %v1646
    %v1714 = vpop.f32.mrb[0].mxu0
    %v1715 = vadd.f32 0.0, %v1714
    %v1716 = vpop.f32.mrb[0].mxu0
    %1717 = vdwg.mxu0
    %v1719 = vrot.slane %v1715, 4
    %v1721 = vadd.f32 %v159, %v1719
    %v1722 = vxor.u32 %v1721, 2147483648
    %v1723 = vmul.f32 %v1722, 1.442695
    %v1724 = vpow.pop %v1723
    %v1725 = vadd.f32 %v1724, 1.0
    %v1726 = vrcp.pop %v1725
    %v1727 = vmul.f32 1.0, %v1726
    %v1728 = vtanh.pop %v1721
    %v1730 = vrot.slane %v1465, 6
    %v1732 = vmul.f32 %v1727, %v1730
    %1734 = vrot.lane.b32.xlu0 %v1728, 64
    %v1735 = vpop.permute.xlu0 %1734
    %v1737 = vmul.f32 %v1727, %v1735
    %1739 = vrot.lane.b32.xlu0 %v1737, 32
    %v1740 = vpop.permute.xlu0 %1739
    %v1742 = vadd.f32 %v1732, %v1740
    %v1743 = vtanh.pop %v1742
    %1745 = vrot.lane.b32.xlu0 %v1743, 64
    %v1746 = vpop.permute.xlu0 %1745
    %v1748 = vmul.f32 %v1727, %v1746
    %1750 = vrot.lane.b32.xlu0 %v1641, 32
    %v1751 = vpop.permute.xlu0 %1750
    %v1752 = vsel %vm162, %v1751, 0
    %1754 = vmatprep.subr.mxu0 0.0
    %1755 = vmatpush1.msra.mxu0 %v68
    %1756 = vmatprep.subr.mxu0 0.0
    %1757 = vmatpush1.msra.mxu0 %v69
    %1758 = vmatprep.subr.mxu0 0.0
    %1759 = vmatpush1.msra.mxu0 %v70
    %1760 = vmatprep.subr.mxu0 0.0
    %1761 = vmatpush1.msra.mxu0 %v71
    %1762 = vmatprep.subr.mxu0 0.0
    %1763 = vmatpush1.msra.mxu0 0.0
    %1764 = vmatprep.subr.mxu0 0.0
    %1765 = vmatpush1.msra.mxu0 0.0
    %1766 = vmatprep.subr.mxu0 0.0
    %1767 = vmatpush1.msra.mxu0 0.0
    %1768 = vmatprep.subr.mxu0 0.0
    %1769 = vmatpush1.msra.mxu0 0.0
    %1770 = vmatprep.subr.mxu0 0.0
    %1771 = vmatpush1.msra.mxu0 0.0
    %1772 = vmatprep.subr.mxu0 0.0
    %1773 = vmatpush1.msra.mxu0 0.0
    %1774 = vmatprep.subr.mxu0 0.0
    %1775 = vmatpush1.msra.mxu0 0.0
    %1776 = vmatprep.subr.mxu0 0.0
    %1777 = vmatpush1.msra.mxu0 0.0
    %1778 = vmatprep.subr.mxu0 0.0
    %1779 = vmatpush1.msra.mxu0 0.0
    %1780 = vmatprep.subr.mxu0 0.0
    %1781 = vmatpush1.msra.mxu0 0.0
    %1782 = vmatprep.subr.mxu0 0.0
    %1783 = vmatpush1.msra.mxu0 0.0
    %1784 = vmatprep.subr.mxu0 0.0
    %1785 = vmatpush1.msra.mxu0 0.0
    %1786 = vmatprep.subr.mxu0 0.0
    %1787 = vmatpush1.msra.mxu0 0.0
    %1788 = vmatprep.subr.mxu0 0.0
    %1789 = vmatpush1.msra.mxu0 0.0
    %1790 = vmatprep.subr.mxu0 0.0
    %1791 = vmatpush1.msra.mxu0 0.0
    %1792 = vmatprep.subr.mxu0 0.0
    %1793 = vmatpush1.msra.mxu0 0.0
    %1794 = vmatprep.subr.mxu0 0.0
    %1795 = vmatpush1.msra.mxu0 0.0
    %1796 = vmatprep.subr.mxu0 0.0
    %1797 = vmatpush1.msra.mxu0 0.0
    %1798 = vmatprep.subr.mxu0 0.0
    %1799 = vmatpush1.msra.mxu0 0.0
    %1800 = vmatprep.subr.mxu0 0.0
    %1801 = vmatpush1.msra.mxu0 0.0
    %1802 = vmatprep.subr.mxu0 0.0
    %1803 = vmatpush1.msra.mxu0 0.0
    %1804 = vmatprep.subr.mxu0 0.0
    %1805 = vmatpush1.msra.mxu0 0.0
    %1806 = vmatprep.subr.mxu0 0.0
    %1807 = vmatpush1.msra.mxu0 0.0
    %1808 = vmatprep.subr.mxu0 0.0
    %1809 = vmatpush1.msra.mxu0 0.0
    %1810 = vmatprep.subr.mxu0 0.0
    %1811 = vmatpush1.msra.mxu0 0.0
    %1812 = vmatprep.subr.mxu0 0.0
    %1813 = vmatpush1.msra.mxu0 0.0
    %1814 = vmatprep.subr.mxu0 0.0
    %1815 = vmatpush1.msra.mxu0 0.0
    %1816 = vmatprep.subr.mxu0 0.0
    %1817 = vmatpush1.msra.mxu0 0.0
    %1818 = vmatprep.mubr.f32.mxu0 0.0
    %1819 = vmatmul.mubr.f32.gmra.mrb[0].mxu0 %v1752
    %v1820 = vpop.f32.mrb[0].mxu0
    %v1821 = vadd.f32 0.0, %v1820
    %v1822 = vpop.f32.mrb[0].mxu0
    %1823 = vdwg.mxu0
    %1824 = vmatprep.subr.mxu0 0.0
    %1825 = vmatpush1.msra.mxu0 %v60
    %1826 = vmatprep.subr.mxu0 0.0
    %1827 = vmatpush1.msra.mxu0 %v61
    %1828 = vmatprep.subr.mxu0 0.0
    %1829 = vmatpush1.msra.mxu0 %v62
    %1830 = vmatprep.subr.mxu0 0.0
    %1831 = vmatpush1.msra.mxu0 %v63
    %1832 = vmatprep.subr.mxu0 0.0
    %1833 = vmatpush1.msra.mxu0 0.0
    %1834 = vmatprep.subr.mxu0 0.0
    %1835 = vmatpush1.msra.mxu0 0.0
    %1836 = vmatprep.subr.mxu0 0.0
    %1837 = vmatpush1.msra.mxu0 0.0
    %1838 = vmatprep.subr.mxu0 0.0
    %1839 = vmatpush1.msra.mxu0 0.0
    %1840 = vmatprep.subr.mxu0 0.0
    %1841 = vmatpush1.msra.mxu0 0.0
    %1842 = vmatprep.subr.mxu0 0.0
    %1843 = vmatpush1.msra.mxu0 0.0
    %1844 = vmatprep.subr.mxu0 0.0
    %1845 = vmatpush1.msra.mxu0 0.0
    %1846 = vmatprep.subr.mxu0 0.0
    %1847 = vmatpush1.msra.mxu0 0.0
    %1848 = vmatprep.subr.mxu0 0.0
    %1849 = vmatpush1.msra.mxu0 0.0
    %1850 = vmatprep.subr.mxu0 0.0
    %1851 = vmatpush1.msra.mxu0 0.0
    %1852 = vmatprep.subr.mxu0 0.0
    %1853 = vmatpush1.msra.mxu0 0.0
    %1854 = vmatprep.subr.mxu0 0.0
    %1855 = vmatpush1.msra.mxu0 0.0
    %1856 = vmatprep.subr.mxu0 0.0
    %1857 = vmatpush1.msra.mxu0 0.0
    %1858 = vmatprep.subr.mxu0 0.0
    %1859 = vmatpush1.msra.mxu0 0.0
    %1860 = vmatprep.subr.mxu0 0.0
    %1861 = vmatpush1.msra.mxu0 0.0
    %1862 = vmatprep.subr.mxu0 0.0
    %1863 = vmatpush1.msra.mxu0 0.0
    %1864 = vmatprep.subr.mxu0 0.0
    %1865 = vmatpush1.msra.mxu0 0.0
    %1866 = vmatprep.subr.mxu0 0.0
    %1867 = vmatpush1.msra.mxu0 0.0
    %1868 = vmatprep.subr.mxu0 0.0
    %1869 = vmatpush1.msra.mxu0 0.0
    %1870 = vmatprep.subr.mxu0 0.0
    %1871 = vmatpush1.msra.mxu0 0.0
    %1872 = vmatprep.subr.mxu0 0.0
    %1873 = vmatpush1.msra.mxu0 0.0
    %1874 = vmatprep.subr.mxu0 0.0
    %1875 = vmatpush1.msra.mxu0 0.0
    %1876 = vmatprep.subr.mxu0 0.0
    %1877 = vmatpush1.msra.mxu0 0.0
    %1878 = vmatprep.subr.mxu0 0.0
    %1879 = vmatpush1.msra.mxu0 0.0
    %1880 = vmatprep.subr.mxu0 0.0
    %1881 = vmatpush1.msra.mxu0 0.0
    %1882 = vmatprep.subr.mxu0 0.0
    %1883 = vmatpush1.msra.mxu0 0.0
    %1884 = vmatprep.subr.mxu0 0.0
    %1885 = vmatpush1.msra.mxu0 0.0
    %1886 = vmatprep.subr.mxu0 0.0
    %1887 = vmatpush1.msra.mxu0 0.0
    %1888 = vmatprep.mubr.f32.mxu0 0.0
    %1889 = vmatmul.mubr.f32.gmra.mrb[0].mxu0 %v1646
    %v1890 = vpop.f32.mrb[0].mxu0
    %v1891 = vadd.f32 %v1821, %v1890
    %v1892 = vpop.f32.mrb[0].mxu0
    %1893 = vdwg.mxu0
    %v1894 = vadd.f32 %v1891, %v511
    %v1895 = vxor.u32 %v1894, 2147483648
    %v1896 = vmul.f32 %v1895, 1.442695
    %v1897 = vpow.pop %v1896
    %v1898 = vadd.f32 %v1897, 1.0
    %v1899 = vrcp.pop %v1898
    %v1900 = vmul.f32 1.0, %v1899
    %v1901 = vtanh.pop %v1894
    %v1902 = vmul.f32 %v1900, %v1635
    %1904 = vrot.lane.b32.xlu0 %v1901, 64
    %v1905 = vpop.permute.xlu0 %1904
    %v1907 = vmul.f32 %v1900, %v1905
    %1909 = vrot.lane.b32.xlu0 %v1907, 32
    %v1910 = vpop.permute.xlu0 %1909
    %v1912 = vadd.f32 %v1902, %v1910
    %v1913 = vtanh.pop %v1912
    %1915 = vrot.lane.b32.xlu0 %v1913, 64
    %v1916 = vpop.permute.xlu0 %1915
    %v1918 = vmul.f32 %v1900, %v1916
    %v1920 = vrot.slane %v1748, 4
    %1921 = vrot.lane.b32.xlu0 %v1920, 32
    %v1922 = vpop.permute.xlu0 %1921
    %v1923 = vsel %vm162, %v1922, 0
    %1925 = vmatprep.subr.mxu0 0.0
    %1926 = vmatpush1.msra.mxu0 %v64
    %1927 = vmatprep.subr.mxu0 0.0
    %1928 = vmatpush1.msra.mxu0 %v65
    %1929 = vmatprep.subr.mxu0 0.0
    %1930 = vmatpush1.msra.mxu0 %v66
    %1931 = vmatprep.subr.mxu0 0.0
    %1932 = vmatpush1.msra.mxu0 %v67
    %1933 = vmatprep.subr.mxu0 0.0
    %1934 = vmatpush1.msra.mxu0 0.0
    %1935 = vmatprep.subr.mxu0 0.0
    %1936 = vmatpush1.msra.mxu0 0.0
    %1937 = vmatprep.subr.mxu0 0.0
    %1938 = vmatpush1.msra.mxu0 0.0
    %1939 = vmatprep.subr.mxu0 0.0
    %1940 = vmatpush1.msra.mxu0 0.0
    %1941 = vmatprep.subr.mxu0 0.0
    %1942 = vmatpush1.msra.mxu0 0.0
    %1943 = vmatprep.subr.mxu0 0.0
    %1944 = vmatpush1.msra.mxu0 0.0
    %1945 = vmatprep.subr.mxu0 0.0
    %1946 = vmatpush1.msra.mxu0 0.0
    %1947 = vmatprep.subr.mxu0 0.0
    %1948 = vmatpush1.msra.mxu0 0.0
    %1949 = vmatprep.subr.mxu0 0.0
    %1950 = vmatpush1.msra.mxu0 0.0
    %1951 = vmatprep.subr.mxu0 0.0
    %1952 = vmatpush1.msra.mxu0 0.0
    %1953 = vmatprep.subr.mxu0 0.0
    %1954 = vmatpush1.msra.mxu0 0.0
    %1955 = vmatprep.subr.mxu0 0.0
    %1956 = vmatpush1.msra.mxu0 0.0
    %1957 = vmatprep.subr.mxu0 0.0
    %1958 = vmatpush1.msra.mxu0 0.0
    %1959 = vmatprep.subr.mxu0 0.0
    %1960 = vmatpush1.msra.mxu0 0.0
    %1961 = vmatprep.subr.mxu0 0.0
    %1962 = vmatpush1.msra.mxu0 0.0
    %1963 = vmatprep.subr.mxu0 0.0
    %1964 = vmatpush1.msra.mxu0 0.0
    %1965 = vmatprep.subr.mxu0 0.0
    %1966 = vmatpush1.msra.mxu0 0.0
    %1967 = vmatprep.subr.mxu0 0.0
    %1968 = vmatpush1.msra.mxu0 0.0
    %1969 = vmatprep.subr.mxu0 0.0
    %1970 = vmatpush1.msra.mxu0 0.0
    %1971 = vmatprep.subr.mxu0 0.0
    %1972 = vmatpush1.msra.mxu0 0.0
    %1973 = vmatprep.subr.mxu0 0.0
    %1974 = vmatpush1.msra.mxu0 0.0
    %1975 = vmatprep.subr.mxu0 0.0
    %1976 = vmatpush1.msra.mxu0 0.0
    %1977 = vmatprep.subr.mxu0 0.0
    %1978 = vmatpush1.msra.mxu0 0.0
    %1979 = vmatprep.subr.mxu0 0.0
    %1980 = vmatpush1.msra.mxu0 0.0
    %1981 = vmatprep.subr.mxu0 0.0
    %1982 = vmatpush1.msra.mxu0 0.0
    %1983 = vmatprep.subr.mxu0 0.0
    %1984 = vmatpush1.msra.mxu0 0.0
    %1985 = vmatprep.subr.mxu0 0.0
    %1986 = vmatpush1.msra.mxu0 0.0
    %1987 = vmatprep.subr.mxu0 0.0
    %1988 = vmatpush1.msra.mxu0 0.0
    %1989 = vmatprep.mubr.f32.mxu0 0.0
    %1990 = vmatmul.mubr.f32.gmra.mrb[0].mxu0 %v1923
    %v1991 = vpop.f32.mrb[0].mxu0
    %v1992 = vadd.f32 0.0, %v1991
    %v1993 = vpop.f32.mrb[0].mxu0
    %1994 = vdwg.mxu0
    %v1996 = vrot.slane %v1992, 2
    %v1998 = vadd.f32 %v159, %v1996
    %v1999 = vxor.u32 %v1998, 2147483648
    %v2000 = vmul.f32 %v1999, 1.442695
    %v2001 = vpow.pop %v2000
    %v2002 = vadd.f32 %v2001, 1.0
    %v2003 = vrcp.pop %v2002
    %v2004 = vmul.f32 1.0, %v2003
    %v2005 = vtanh.pop %v1998
    %v2007 = vrot.slane %v1742, 6
    %v2009 = vmul.f32 %v2004, %v2007
    %2011 = vrot.lane.b32.xlu0 %v2005, 64
    %v2012 = vpop.permute.xlu0 %2011
    %v2014 = vmul.f32 %v2004, %v2012
    %2016 = vrot.lane.b32.xlu0 %v2014, 32
    %v2017 = vpop.permute.xlu0 %2016
    %v2019 = vadd.f32 %v2009, %v2017
    %v2020 = vtanh.pop %v2019
    %2022 = vrot.lane.b32.xlu0 %v2020, 64
    %v2023 = vpop.permute.xlu0 %2022
    %v2025 = vmul.f32 %v2004, %v2023
    %2027 = vrot.lane.b32.xlu0 %v1918, 32
    %v2028 = vpop.permute.xlu0 %2027
    %v2029 = vsel %vm162, %v2028, 0
    %2031 = vmatprep.subr.mxu0 0.0
    %2032 = vmatpush1.msra.mxu0 %v68
    %2033 = vmatprep.subr.mxu0 0.0
    %2034 = vmatpush1.msra.mxu0 %v69
    %2035 = vmatprep.subr.mxu0 0.0
    %2036 = vmatpush1.msra.mxu0 %v70
    %2037 = vmatprep.subr.mxu0 0.0
    %2038 = vmatpush1.msra.mxu0 %v71
    %2039 = vmatprep.subr.mxu0 0.0
    %2040 = vmatpush1.msra.mxu0 0.0
    %2041 = vmatprep.subr.mxu0 0.0
    %2042 = vmatpush1.msra.mxu0 0.0
    %2043 = vmatprep.subr.mxu0 0.0
    %2044 = vmatpush1.msra.mxu0 0.0
    %2045 = vmatprep.subr.mxu0 0.0
    %2046 = vmatpush1.msra.mxu0 0.0
    %2047 = vmatprep.subr.mxu0 0.0
    %2048 = vmatpush1.msra.mxu0 0.0
    %2049 = vmatprep.subr.mxu0 0.0
    %2050 = vmatpush1.msra.mxu0 0.0
    %2051 = vmatprep.subr.mxu0 0.0
    %2052 = vmatpush1.msra.mxu0 0.0
    %2053 = vmatprep.subr.mxu0 0.0
    %2054 = vmatpush1.msra.mxu0 0.0
    %2055 = vmatprep.subr.mxu0 0.0
    %2056 = vmatpush1.msra.mxu0 0.0
    %2057 = vmatprep.subr.mxu0 0.0
    %2058 = vmatpush1.msra.mxu0 0.0
    %2059 = vmatprep.subr.mxu0 0.0
    %2060 = vmatpush1.msra.mxu0 0.0
    %2061 = vmatprep.subr.mxu0 0.0
    %2062 = vmatpush1.msra.mxu0 0.0
    %2063 = vmatprep.subr.mxu0 0.0
    %2064 = vmatpush1.msra.mxu0 0.0
    %2065 = vmatprep.subr.mxu0 0.0
    %2066 = vmatpush1.msra.mxu0 0.0
    %2067 = vmatprep.subr.mxu0 0.0
    %2068 = vmatpush1.msra.mxu0 0.0
    %2069 = vmatprep.subr.mxu0 0.0
    %2070 = vmatpush1.msra.mxu0 0.0
    %2071 = vmatprep.subr.mxu0 0.0
    %2072 = vmatpush1.msra.mxu0 0.0
    %2073 = vmatprep.subr.mxu0 0.0
    %2074 = vmatpush1.msra.mxu0 0.0
    %2075 = vmatprep.subr.mxu0 0.0
    %2076 = vmatpush1.msra.mxu0 0.0
    %2077 = vmatprep.subr.mxu0 0.0
    %2078 = vmatpush1.msra.mxu0 0.0
    %2079 = vmatprep.subr.mxu0 0.0
    %2080 = vmatpush1.msra.mxu0 0.0
    %2081 = vmatprep.subr.mxu0 0.0
    %2082 = vmatpush1.msra.mxu0 0.0
    %2083 = vmatprep.subr.mxu0 0.0
    %2084 = vmatpush1.msra.mxu0 0.0
    %2085 = vmatprep.subr.mxu0 0.0
    %2086 = vmatpush1.msra.mxu0 0.0
    %2087 = vmatprep.subr.mxu0 0.0
    %2088 = vmatpush1.msra.mxu0 0.0
    %2089 = vmatprep.subr.mxu0 0.0
    %2090 = vmatpush1.msra.mxu0 0.0
    %2091 = vmatprep.subr.mxu0 0.0
    %2092 = vmatpush1.msra.mxu0 0.0
    %2093 = vmatprep.subr.mxu0 0.0
    %2094 = vmatpush1.msra.mxu0 0.0
    %2095 = vmatprep.mubr.f32.mxu0 0.0
    %2096 = vmatmul.mubr.f32.gmra.mrb[0].mxu0 %v2029
    %v2097 = vpop.f32.mrb[0].mxu0
    %v2098 = vadd.f32 0.0, %v2097
    %v2099 = vpop.f32.mrb[0].mxu0
    %2100 = vdwg.mxu0
    %2101 = vmatprep.subr.mxu0 0.0
    %2102 = vmatpush1.msra.mxu0 %v60
    %2103 = vmatprep.subr.mxu0 0.0
    %2104 = vmatpush1.msra.mxu0 %v61
    %2105 = vmatprep.subr.mxu0 0.0
    %2106 = vmatpush1.msra.mxu0 %v62
    %2107 = vmatprep.subr.mxu0 0.0
    %2108 = vmatpush1.msra.mxu0 %v63
    %2109 = vmatprep.subr.mxu0 0.0
    %2110 = vmatpush1.msra.mxu0 0.0
    %2111 = vmatprep.subr.mxu0 0.0
    %2112 = vmatpush1.msra.mxu0 0.0
    %2113 = vmatprep.subr.mxu0 0.0
    %2114 = vmatpush1.msra.mxu0 0.0
    %2115 = vmatprep.subr.mxu0 0.0
    %2116 = vmatpush1.msra.mxu0 0.0
    %2117 = vmatprep.subr.mxu0 0.0
    %2118 = vmatpush1.msra.mxu0 0.0
    %2119 = vmatprep.subr.mxu0 0.0
    %2120 = vmatpush1.msra.mxu0 0.0
    %2121 = vmatprep.subr.mxu0 0.0
    %2122 = vmatpush1.msra.mxu0 0.0
    %2123 = vmatprep.subr.mxu0 0.0
    %2124 = vmatpush1.msra.mxu0 0.0
    %2125 = vmatprep.subr.mxu0 0.0
    %2126 = vmatpush1.msra.mxu0 0.0
    %2127 = vmatprep.subr.mxu0 0.0
    %2128 = vmatpush1.msra.mxu0 0.0
    %2129 = vmatprep.subr.mxu0 0.0
    %2130 = vmatpush1.msra.mxu0 0.0
    %2131 = vmatprep.subr.mxu0 0.0
    %2132 = vmatpush1.msra.mxu0 0.0
    %2133 = vmatprep.subr.mxu0 0.0
    %2134 = vmatpush1.msra.mxu0 0.0
    %2135 = vmatprep.subr.mxu0 0.0
    %2136 = vmatpush1.msra.mxu0 0.0
    %2137 = vmatprep.subr.mxu0 0.0
    %2138 = vmatpush1.msra.mxu0 0.0
    %2139 = vmatprep.subr.mxu0 0.0
    %2140 = vmatpush1.msra.mxu0 0.0
    %2141 = vmatprep.subr.mxu0 0.0
    %2142 = vmatpush1.msra.mxu0 0.0
    %2143 = vmatprep.subr.mxu0 0.0
    %2144 = vmatpush1.msra.mxu0 0.0
    %2145 = vmatprep.subr.mxu0 0.0
    %2146 = vmatpush1.msra.mxu0 0.0
    %2147 = vmatprep.subr.mxu0 0.0
    %2148 = vmatpush1.msra.mxu0 0.0
    %2149 = vmatprep.subr.mxu0 0.0
    %2150 = vmatpush1.msra.mxu0 0.0
    %2151 = vmatprep.subr.mxu0 0.0
    %2152 = vmatpush1.msra.mxu0 0.0
    %2153 = vmatprep.subr.mxu0 0.0
    %2154 = vmatpush1.msra.mxu0 0.0
    %2155 = vmatprep.subr.mxu0 0.0
    %2156 = vmatpush1.msra.mxu0 0.0
    %2157 = vmatprep.subr.mxu0 0.0
    %2158 = vmatpush1.msra.mxu0 0.0
    %2159 = vmatprep.subr.mxu0 0.0
    %2160 = vmatpush1.msra.mxu0 0.0
    %2161 = vmatprep.subr.mxu0 0.0
    %2162 = vmatpush1.msra.mxu0 0.0
    %2163 = vmatprep.subr.mxu0 0.0
    %2164 = vmatpush1.msra.mxu0 0.0
    %2165 = vmatprep.mubr.f32.mxu0 0.0
    %2166 = vmatmul.mubr.f32.gmra.mrb[0].mxu0 %v1923
    %v2167 = vpop.f32.mrb[0].mxu0
    %v2168 = vadd.f32 %v2098, %v2167
    %v2169 = vpop.f32.mrb[0].mxu0
    %2170 = vdwg.mxu0
    %v2171 = vadd.f32 %v2168, %v511
    %v2172 = vxor.u32 %v2171, 2147483648
    %v2173 = vmul.f32 %v2172, 1.442695
    %v2174 = vpow.pop %v2173
    %v2175 = vadd.f32 %v2174, 1.0
    %v2176 = vrcp.pop %v2175
    %v2177 = vmul.f32 1.0, %v2176
    %v2178 = vtanh.pop %v2171
    %v2179 = vmul.f32 %v2177, %v1912
    %2181 = vrot.lane.b32.xlu0 %v2178, 64
    %v2182 = vpop.permute.xlu0 %2181
    %v2184 = vmul.f32 %v2177, %v2182
    %2186 = vrot.lane.b32.xlu0 %v2184, 32
    %v2187 = vpop.permute.xlu0 %2186
    %v2189 = vadd.f32 %v2179, %v2187
    %v2190 = vtanh.pop %v2189
    %2192 = vrot.lane.b32.xlu0 %v2190, 64
    %v2193 = vpop.permute.xlu0 %2192
    %v2195 = vmul.f32 %v2177, %v2193
    %2197 = vrot.lane.b32.xlu0 %v2195, 32
    %v2198 = vpop.permute.xlu0 %2197
    %v2199 = vsel %vm162, %v2198, 0
    %2201 = vmatprep.subr.mxu0 0.0
    %2202 = vmatpush1.msra.mxu0 %v68
    %2203 = vmatprep.subr.mxu0 0.0
    %2204 = vmatpush1.msra.mxu0 %v69
    %2205 = vmatprep.subr.mxu0 0.0
    %2206 = vmatpush1.msra.mxu0 %v70
    %2207 = vmatprep.subr.mxu0 0.0
    %2208 = vmatpush1.msra.mxu0 %v71
    %2209 = vmatprep.subr.mxu0 0.0
    %2210 = vmatpush1.msra.mxu0 0.0
    %2211 = vmatprep.subr.mxu0 0.0
    %2212 = vmatpush1.msra.mxu0 0.0
    %2213 = vmatprep.subr.mxu0 0.0
    %2214 = vmatpush1.msra.mxu0 0.0
    %2215 = vmatprep.subr.mxu0 0.0
    %2216 = vmatpush1.msra.mxu0 0.0
    %2217 = vmatprep.subr.mxu0 0.0
    %2218 = vmatpush1.msra.mxu0 0.0
    %2219 = vmatprep.subr.mxu0 0.0
    %2220 = vmatpush1.msra.mxu0 0.0
    %2221 = vmatprep.subr.mxu0 0.0
    %2222 = vmatpush1.msra.mxu0 0.0
    %2223 = vmatprep.subr.mxu0 0.0
    %2224 = vmatpush1.msra.mxu0 0.0
    %2225 = vmatprep.subr.mxu0 0.0
    %2226 = vmatpush1.msra.mxu0 0.0
    %2227 = vmatprep.subr.mxu0 0.0
    %2228 = vmatpush1.msra.mxu0 0.0
    %2229 = vmatprep.subr.mxu0 0.0
    %2230 = vmatpush1.msra.mxu0 0.0
    %2231 = vmatprep.subr.mxu0 0.0
    %2232 = vmatpush1.msra.mxu0 0.0
    %2233 = vmatprep.subr.mxu0 0.0
    %2234 = vmatpush1.msra.mxu0 0.0
    %2235 = vmatprep.subr.mxu0 0.0
    %2236 = vmatpush1.msra.mxu0 0.0
    %2237 = vmatprep.subr.mxu0 0.0
    %2238 = vmatpush1.msra.mxu0 0.0
    %2239 = vmatprep.subr.mxu0 0.0
    %2240 = vmatpush1.msra.mxu0 0.0
    %2241 = vmatprep.subr.mxu0 0.0
    %2242 = vmatpush1.msra.mxu0 0.0
    %2243 = vmatprep.subr.mxu0 0.0
    %2244 = vmatpush1.msra.mxu0 0.0
    %2245 = vmatprep.subr.mxu0 0.0
    %2246 = vmatpush1.msra.mxu0 0.0
    %2247 = vmatprep.subr.mxu0 0.0
    %2248 = vmatpush1.msra.mxu0 0.0
    %2249 = vmatprep.subr.mxu0 0.0
    %2250 = vmatpush1.msra.mxu0 0.0
    %2251 = vmatprep.subr.mxu0 0.0
    %2252 = vmatpush1.msra.mxu0 0.0
    %2253 = vmatprep.subr.mxu0 0.0
    %2254 = vmatpush1.msra.mxu0 0.0
    %2255 = vmatprep.subr.mxu0 0.0
    %2256 = vmatpush1.msra.mxu0 0.0
    %2257 = vmatprep.subr.mxu0 0.0
    %2258 = vmatpush1.msra.mxu0 0.0
    %2259 = vmatprep.subr.mxu0 0.0
    %2260 = vmatpush1.msra.mxu0 0.0
    %2261 = vmatprep.subr.mxu0 0.0
    %2262 = vmatpush1.msra.mxu0 0.0
    %2263 = vmatprep.subr.mxu0 0.0
    %2264 = vmatpush1.msra.mxu0 0.0
    %2265 = vmatprep.mubr.f32.mxu0 0.0
    %2266 = vmatmul.mubr.f32.gmra.mrb[0].mxu0 %v2199
    %v2267 = vpop.f32.mrb[0].mxu0
    %v2268 = vadd.f32 0.0, %v2267
    %v2269 = vpop.f32.mrb[0].mxu0
    %2270 = vdwg.mxu0
    %v2272 = vrot.slane %v2025, 6
    %2273 = vrot.lane.b32.xlu0 %v2272, 32
    %v2274 = vpop.permute.xlu0 %2273
    %v2275 = vsel %vm162, %v2274, 0
    %2277 = vmatprep.subr.mxu0 0.0
    %2278 = vmatpush1.msra.mxu0 %v60
    %2279 = vmatprep.subr.mxu0 0.0
    %2280 = vmatpush1.msra.mxu0 %v61
    %2281 = vmatprep.subr.mxu0 0.0
    %2282 = vmatpush1.msra.mxu0 %v62
    %2283 = vmatprep.subr.mxu0 0.0
    %2284 = vmatpush1.msra.mxu0 %v63
    %2285 = vmatprep.subr.mxu0 0.0
    %2286 = vmatpush1.msra.mxu0 0.0
    %2287 = vmatprep.subr.mxu0 0.0
    %2288 = vmatpush1.msra.mxu0 0.0
    %2289 = vmatprep.subr.mxu0 0.0
    %2290 = vmatpush1.msra.mxu0 0.0
    %2291 = vmatprep.subr.mxu0 0.0
    %2292 = vmatpush1.msra.mxu0 0.0
    %2293 = vmatprep.subr.mxu0 0.0
    %2294 = vmatpush1.msra.mxu0 0.0
    %2295 = vmatprep.subr.mxu0 0.0
    %2296 = vmatpush1.msra.mxu0 0.0
    %2297 = vmatprep.subr.mxu0 0.0
    %2298 = vmatpush1.msra.mxu0 0.0
    %2299 = vmatprep.subr.mxu0 0.0
    %2300 = vmatpush1.msra.mxu0 0.0
    %2301 = vmatprep.subr.mxu0 0.0
    %2302 = vmatpush1.msra.mxu0 0.0
    %2303 = vmatprep.subr.mxu0 0.0
    %2304 = vmatpush1.msra.mxu0 0.0
    %2305 = vmatprep.subr.mxu0 0.0
    %2306 = vmatpush1.msra.mxu0 0.0
    %2307 = vmatprep.subr.mxu0 0.0
    %2308 = vmatpush1.msra.mxu0 0.0
    %2309 = vmatprep.subr.mxu0 0.0
    %2310 = vmatpush1.msra.mxu0 0.0
    %2311 = vmatprep.subr.mxu0 0.0
    %2312 = vmatpush1.msra.mxu0 0.0
    %2313 = vmatprep.subr.mxu0 0.0
    %2314 = vmatpush1.msra.mxu0 0.0
    %2315 = vmatprep.subr.mxu0 0.0
    %2316 = vmatpush1.msra.mxu0 0.0
    %2317 = vmatprep.subr.mxu0 0.0
    %2318 = vmatpush1.msra.mxu0 0.0
    %2319 = vmatprep.subr.mxu0 0.0
    %2320 = vmatpush1.msra.mxu0 0.0
    %2321 = vmatprep.subr.mxu0 0.0
    %2322 = vmatpush1.msra.mxu0 0.0
    %2323 = vmatprep.subr.mxu0 0.0
    %2324 = vmatpush1.msra.mxu0 0.0
    %2325 = vmatprep.subr.mxu0 0.0
    %2326 = vmatpush1.msra.mxu0 0.0
    %2327 = vmatprep.subr.mxu0 0.0
    %2328 = vmatpush1.msra.mxu0 0.0
    %2329 = vmatprep.subr.mxu0 0.0
    %2330 = vmatpush1.msra.mxu0 0.0
    %2331 = vmatprep.subr.mxu0 0.0
    %2332 = vmatpush1.msra.mxu0 0.0
    %2333 = vmatprep.subr.mxu0 0.0
    %2334 = vmatpush1.msra.mxu0 0.0
    %2335 = vmatprep.subr.mxu0 0.0
    %2336 = vmatpush1.msra.mxu0 0.0
    %2337 = vmatprep.subr.mxu0 0.0
    %2338 = vmatpush1.msra.mxu0 0.0
    %2339 = vmatprep.subr.mxu0 0.0
    %2340 = vmatpush1.msra.mxu0 0.0
    %2341 = vmatprep.mubr.f32.mxu0 0.0
    %2342 = vmatmul.mubr.f32.gmra.mrb[0].mxu0 %v2275
    %v2343 = vpop.f32.mrb[0].mxu0
    %v2344 = vadd.f32 %v2268, %v2343
    %v2345 = vpop.f32.mrb[0].mxu0
    %2346 = vdwg.mxu0
    %v2347 = vadd.f32 %v2344, %v511
    %v2348 = vxor.u32 %v2347, 2147483648
    %v2349 = vmul.f32 %v2348, 1.442695
    %v2350 = vpow.pop %v2349
    %v2351 = vadd.f32 %v2350, 1.0
    %v2352 = vrcp.pop %v2351
    %v2353 = vmul.f32 1.0, %v2352
    %v2354 = vtanh.pop %v2347
    %v2355 = vmul.f32 %v2353, %v2189
    %2357 = vrot.lane.b32.xlu0 %v2354, 64
    %v2358 = vpop.permute.xlu0 %2357
    %v2360 = vmul.f32 %v2353, %v2358
    %2362 = vrot.lane.b32.xlu0 %v2360, 32
    %v2363 = vpop.permute.xlu0 %2362
    %v2365 = vadd.f32 %v2355, %v2363
    %v2366 = vtanh.pop %v2365
    %2368 = vrot.lane.b32.xlu0 %v2366, 64
    %v2369 = vpop.permute.xlu0 %2368
    %v2371 = vmul.f32 %v2353, %v2369
    %v2372 = vld [vmem:[%s7] sm:$0xff]
    %v2373 = vld [vmem:[%s7 + $0x8] sm:$0xff]
    %v2374 = vld [vmem:[%s7 + $0x10] sm:$0xff]
    %v2375 = vld [vmem:[%s7 + $0x18] sm:$0xff]
    %v2376 = vld [vmem:[#allocation5] sm:$0x1]
    %v2378 = vlaneseq
    %v2379 = vshrl.u32 %v2378, 7
    %v2380 = vsub.s32 0, %v2379
    %v2381 = vrot.slane %v2376, %v2380
    %2384 = vrot.lane.b32.xlu0 %v2371, 32
    %v2385 = vpop.permute.xlu0 %2384
    %v2386 = vsel %vm162, %v2385, 0
    %2388 = vmatprep.subr.mxu0 0.0
    %2389 = vmatpush1.msra.mxu0 %v2372
    %2390 = vmatprep.subr.mxu0 0.0
    %2391 = vmatpush1.msra.mxu0 %v2373
    %2392 = vmatprep.subr.mxu0 0.0
    %2393 = vmatpush1.msra.mxu0 %v2374
    %2394 = vmatprep.subr.mxu0 0.0
    %2395 = vmatpush1.msra.mxu0 %v2375
    %2396 = vmatprep.subr.mxu0 0.0
    %2397 = vmatpush1.msra.mxu0 0.0
    %2398 = vmatprep.subr.mxu0 0.0
    %2399 = vmatpush1.msra.mxu0 0.0
    %2400 = vmatprep.subr.mxu0 0.0
    %2401 = vmatpush1.msra.mxu0 0.0
    %2402 = vmatprep.subr.mxu0 0.0
    %2403 = vmatpush1.msra.mxu0 0.0
    %2404 = vmatprep.subr.mxu0 0.0
    %2405 = vmatpush1.msra.mxu0 0.0
    %2406 = vmatprep.subr.mxu0 0.0
    %2407 = vmatpush1.msra.mxu0 0.0
    %2408 = vmatprep.subr.mxu0 0.0
    %2409 = vmatpush1.msra.mxu0 0.0
    %2410 = vmatprep.subr.mxu0 0.0
    %2411 = vmatpush1.msra.mxu0 0.0
    %2412 = vmatprep.subr.mxu0 0.0
    %2413 = vmatpush1.msra.mxu0 0.0
    %2414 = vmatprep.subr.mxu0 0.0
    %2415 = vmatpush1.msra.mxu0 0.0
    %2416 = vmatprep.subr.mxu0 0.0
    %2417 = vmatpush1.msra.mxu0 0.0
    %2418 = vmatprep.subr.mxu0 0.0
    %2419 = vmatpush1.msra.mxu0 0.0
    %2420 = vmatprep.subr.mxu0 0.0
    %2421 = vmatpush1.msra.mxu0 0.0
    %2422 = vmatprep.subr.mxu0 0.0
    %2423 = vmatpush1.msra.mxu0 0.0
    %2424 = vmatprep.subr.mxu0 0.0
    %2425 = vmatpush1.msra.mxu0 0.0
    %2426 = vmatprep.subr.mxu0 0.0
    %2427 = vmatpush1.msra.mxu0 0.0
    %2428 = vmatprep.subr.mxu0 0.0
    %2429 = vmatpush1.msra.mxu0 0.0
    %2430 = vmatprep.subr.mxu0 0.0
    %2431 = vmatpush1.msra.mxu0 0.0
    %2432 = vmatprep.subr.mxu0 0.0
    %2433 = vmatpush1.msra.mxu0 0.0
    %2434 = vmatprep.subr.mxu0 0.0
    %2435 = vmatpush1.msra.mxu0 0.0
    %2436 = vmatprep.subr.mxu0 0.0
    %2437 = vmatpush1.msra.mxu0 0.0
    %2438 = vmatprep.subr.mxu0 0.0
    %2439 = vmatpush1.msra.mxu0 0.0
    %2440 = vmatprep.subr.mxu0 0.0
    %2441 = vmatpush1.msra.mxu0 0.0
    %2442 = vmatprep.subr.mxu0 0.0
    %2443 = vmatpush1.msra.mxu0 0.0
    %2444 = vmatprep.subr.mxu0 0.0
    %2445 = vmatpush1.msra.mxu0 0.0
    %2446 = vmatprep.subr.mxu0 0.0
    %2447 = vmatpush1.msra.mxu0 0.0
    %2448 = vmatprep.subr.mxu0 0.0
    %2449 = vmatpush1.msra.mxu0 0.0
    %2450 = vmatprep.subr.mxu0 0.0
    %2451 = vmatpush1.msra.mxu0 0.0
    %2452 = vmatprep.mubr.f32.mxu0 0.0
    %2453 = vmatmul.mubr.f32.gmra.mrb[0].mxu0 %v2386
    %v2454 = vpop.f32.mrb[0].mxu0
    %v2455 = vadd.f32 %v2381, %v2454
    %v2456 = vpop.f32.mrb[0].mxu0
    %2457 = vdwg.mxu0
    %vm2458 = vcmask 25600
    %2459 = vst.msk [vmem:[#allocation7] sm:$0x3] %vm2458, %v2455
    // Predicated region
    $region46: #{lstm_model_forward.1} parent=1 // pred_check
      _
    $region47: #{lstm_model_forward.1} parent=1 // pred_check_branch
      %2461 = sbr.rel (0) target = $region49
    $region48: #{lstm_model_forward.1} parent=1 // pred_region
      %s2463 = ssub.s32 32, 32
      %2464 = vsyncadd [#allocation4], %s2463
      %s2466 = sshll.u32 [#allocation7], 4
      %s2467 = int_to_ptr.vmem [resolvable:$true] %s2466
      %2469 = dma.vmem_to_hbm [thread:$0]  %s2467, 32, %s9, [#allocation4]
    $region49: #{lstm_model_forward.1} parent=1 // pred_fallthru
      _
    // Predicated region
    $region50: #{lstm_model_forward.1} parent=1 // pred_check
      _
    $region51: #{lstm_model_forward.1} parent=1 // pred_check_branch
      %2471 = sbr.rel (0) target = $region53
    $region52: #{lstm_model_forward.1} parent=1 // pred_region
      %2472 = dma.done [#allocation4], 32
    $region53: #{lstm_model_forward.1} parent=1 // pred_fallthru
      _
    %2473 = vsyncpa [#allocation3], 1
    %2474 = vsyncpa [#allocation6], 1
    %2475 = vsyncpa [#allocation4], 1

</llo_original>
